<compile_context>
chip_gen: v7x
topology: tpu7x:2x2x1
jax: 0.10.0
libtpu: 0.0.40
codegen_flags: <defaults>
</compile_context>

<pallas_src>
import functools

import jax
import jax.numpy as jnp
import numpy as np
from jax.experimental import pallas as pl
from jax.experimental.pallas import tpu as pltpu


def _make_reduce_kernel(num_segments):
    """Pass 1: per-core-split segment partial sums (lane-dense) + counts (compact)."""

    def kernel(sel_ref, x_ref, idx_ref, sum_ref, cnt_ref):
        @pl.when(pl.program_id(1) == 0)
        def _init():
            sum_ref[...] = jnp.zeros_like(sum_ref)
            cnt_ref[...] = jnp.zeros_like(cnt_ref)

        x = x_ref[...]                                    # (TR, 128) f32 packed points
        idx = idx_ref[...]                                # (TR, P) int32 compact ids
        # ids[r, l] = idx[r, l // C] via a tiny bf16 selector matmul (MXU, hoisted sel).
        ids = jnp.dot(idx.astype(jnp.bfloat16), sel_ref[...],
                      preferred_element_type=jnp.float32)  # (TR, 128)

        for s in range(num_segments):                     # S is small
            part = jnp.sum(jnp.where(ids == float(s), x, 0.0),
                           axis=0, keepdims=True)          # (1, 128)
            sum_ref[pl.ds(s, 1), :] += part                # direct row accumulate
            # Counts from the compact (TR, P) ids: C x fewer lanes of VALU work.
            cpart = jnp.sum((idx == s).astype(jnp.float32),
                            axis=0, keepdims=True)         # (1, P)
            cnt_ref[pl.ds(s, 1), :] += cpart

    return kernel


def _apply_kernel(colmap_ref, segcol_ref, thi_ref, tlo_ref, x_ref, idx_ref, o_ref):
    """Pass 2: one-hot MXU gather of the lane-placed scale table, then multiply."""
    idx = idx_ref[...]                                     # (TR, P) int32
    # idx_rep[r, j] = idx[r, j % P] (hoisted selector matmul, exact for ids < 256).
    idx_rep = jnp.dot(idx.astype(jnp.bfloat16), colmap_ref[...],
                      preferred_element_type=jnp.float32)  # (TR, S*P)
    onehot = (idx_rep == segcol_ref[...]).astype(jnp.bfloat16)  # (TR, S*P) 0/1
    # hi/lo bf16 table split reconstructs the f32 scale exactly enough (~2^-17 rel).
    g = jnp.dot(onehot, thi_ref[...], preferred_element_type=jnp.float32)
    g = g + jnp.dot(onehot, tlo_ref[...], preferred_element_type=jnp.float32)
    o_ref[...] = x_ref[...] * g                            # ids >= S (padding) -> 0


@functools.partial(jax.jit,
                   static_argnames=("num_segments", "tile_points", "num_core_splits"))
def flatten_se_layer(x, indices, w1, w2, *, num_segments,
                     tile_points=32768, num_core_splits=2):
    """x: (N, C) f32, indices: (N,), w1: (C, C//r), w2: (C//r, C) pre-transposed."""
    n, c = x.shape
    if c > 128 or 128 % c != 0:
        # TODO(synk): fall back to an unpacked (tile, C) layout when C doesn't divide 128.
        raise NotImplementedError("packed layout requires C to divide 128")
    if num_segments >= 256:
        # TODO(synk): large-S path (block the scale table over segments).
        raise NotImplementedError("one-hot gather path assumes a small segment count")

    p = 128 // c                         # points packed per 128-lane VMEM row
    lanes = p * c                        # == 128
    row_quant = 8 * p                    # points per (8, 128) f32 tile quantum
    tile_points = max(row_quant, (min(tile_points, n) // row_quant) * row_quant)
    tr = tile_points // p                # packed rows per tile

    idx = indices.astype(jnp.int32)
    if n % p != 0:
        # TODO(synk): handle the (< p points) tail without the full-copy pad of x.
        x = jnp.pad(x, ((0, p - n % p), (0, 0)))
    rows_x = x.shape[0] // p
    x_packed = x.reshape(rows_x, lanes)  # lane-dense view; row-major reshape, no copy

    num_tiles = pl.cdiv(rows_x, tr)
    nsplit = max(1, min(num_core_splits, num_tiles))  # leading parallel axis (2 TCs on v7x)
    tiles_per_split = pl.cdiv(num_tiles, nsplit)
    grid_rows = nsplit * tiles_per_split * tr
    last_block = num_tiles - 1

    # Only the cheap (N,) ids are padded to the full grid extent; x is left ragged.
    idx = jnp.pad(idx, (0, grid_rows * p - n), constant_values=num_segments)
    idx_packed = idx.reshape(grid_rows, p)
    # TODO(synk): store packed ids as uint8 (< 256) to cut index HBM traffic further.

    # Hoisted selector constants (tiny, resident blocks in both passes).
    sel = (jnp.arange(lanes)[None, :] // c
           == jnp.arange(p)[:, None]).astype(jnp.bfloat16)            # (P, 128)
    sxp = num_segments * p
    jcol = jnp.arange(sxp)
    colmap = (jcol[None, :] % p
              == jnp.arange(p)[:, None]).astype(jnp.bfloat16)         # (P, S*P)
    segcol = (jcol // p).astype(jnp.float32)[None, :]                  # (1, S*P)

    # ---- Pass 1: per-split segment partial sums / counts ------------------------
    part_sums, part_cnts = pl.pallas_call(
        _make_reduce_kernel(num_segments),
        out_shape=(jax.ShapeDtypeStruct((nsplit, num_segments, lanes), jnp.float32),
                   jax.ShapeDtypeStruct((nsplit, num_segments, p), jnp.float32)),
        grid_spec=pltpu.PrefetchScalarGridSpec(
            num_scalar_prefetch=0,
            grid=(nsplit, tiles_per_split),
            in_specs=[
                pl.BlockSpec((p, lanes), lambda cs, i: (0, 0)),
                pl.BlockSpec(
                    (tr, lanes),
                    lambda cs, i: (jnp.minimum(cs * tiles_per_split + i, last_block), 0)),
                pl.BlockSpec((tr, p), lambda cs, i: (cs * tiles_per_split + i, 0)),
            ],
            out_specs=(
                pl.BlockSpec((None, num_segments, lanes), lambda cs, i: (cs, 0, 0)),
                pl.BlockSpec((None, num_segments, p), lambda cs, i: (cs, 0, 0)),
            ),
        ),
        compiler_params=pltpu.CompilerParams(
            dimension_semantics=("parallel", "arbitrary"),
            vmem_limit_bytes=48 * 1024 * 1024),   # safe on v7x (64 MiB) and v5e/v6e
    )(sel, x_packed, idx_packed)

    # ---- Tiny plain-JAX epilogue: combine splits, mean, FC -> ReLU -> FC -> sigmoid
    seg_sum = part_sums.sum(axis=0).reshape(num_segments, p, c).sum(axis=1)  # (S, C)
    seg_cnt = part_cnts.sum(axis=(0, 2))[:, None]                            # (S, 1)
    seg_mean = seg_sum / jnp.maximum(seg_cnt, 1.0)                           # empty seg -> 0
    h = jnp.maximum(seg_mean @ w1, 0.0)
    scale = jax.nn.sigmoid(h @ w2)                                           # (S, C) f32

    # Lane-placed gather table: table[s*P+q, l] = scale[s, l%C] if l//C == q else 0.
    scale_lanes = jnp.tile(scale, (1, p))                                    # (S, 128)
    table = jnp.repeat(scale_lanes, p, axis=0)                               # (S*P, 128)
    lane_q = (jnp.arange(lanes) // c)[None, :]
    row_q = (jnp.arange(sxp) % p)[:, None]
    table = jnp.where(lane_q == row_q, table, 0.0)
    t_hi = table.astype(jnp.bfloat16)
    t_lo = (table - t_hi.astype(jnp.float32)).astype(jnp.bfloat16)

    # ---- Pass 2: streaming one-hot MXU gather + elementwise multiply ------------
    out_packed = pl.pallas_call(
        _apply_kernel,
        out_shape=jax.ShapeDtypeStruct((rows_x, lanes), jnp.float32),
        grid_spec=pltpu.PrefetchScalarGridSpec(
            num_scalar_prefetch=0,
            grid=(num_tiles,),
            in_specs=[
                pl.BlockSpec((p, sxp), lambda i: (0, 0)),       # colmap
                pl.BlockSpec((1, sxp), lambda i: (0, 0)),       # segcol
                pl.BlockSpec((sxp, lanes), lambda i: (0, 0)),   # table hi
                pl.BlockSpec((sxp, lanes), lambda i: (0, 0)),   # table lo
                pl.BlockSpec((tr, lanes), lambda i: (i, 0)),    # x
                pl.BlockSpec((tr, p), lambda i: (i, 0)),        # ids
            ],
            out_specs=pl.BlockSpec((tr, lanes), lambda i: (i, 0)),
        ),
        compiler_params=pltpu.CompilerParams(
            dimension_semantics=("parallel",),                   # megacore-splittable
            vmem_limit_bytes=48 * 1024 * 1024),
    )(colmap, segcol, t_hi, t_lo, x_packed, idx_packed)

    return out_packed.reshape(rows_x * p, c)[:n]


def _reference(x, indices, w1, w2, num_segments):
    # Pure-JAX reference of the PyTorch forward.
    sums = jax.ops.segment_sum(x, indices, num_segments=num_segments)
    counts = jax.ops.segment_sum(jnp.ones((x.shape[0],), jnp.float32), indices,
                                 num_segments=num_segments)
    seg_mean = sums / jnp.maximum(counts, 1.0)[:, None]
    h = jnp.maximum(seg_mean @ w1, 0.0)
    scale = jax.nn.sigmoid(h @ w2)
    return x * scale[indices]


if __name__ == "__main__":
    # Small shapes consistent with the module's (N, C) flattened-points forward.
    N = 1024           # number of flattened points
    C = 16             # channels
    REDUCTION = 4
    CR = C // REDUCTION
    NUM_SEGMENTS = 4   # number of distinct batch indices
    TILE_POINTS = 256  # small tile at demo size: 4 grid tiles / 2 splits (exercises pipeline)

    key = jax.random.PRNGKey(0)
    kx, ki, k1, k2 = jax.random.split(key, 4)

    x = jax.random.normal(kx, (N, C), dtype=jnp.float32)
    indices = jax.random.randint(ki, (N,), 0, NUM_SEGMENTS, dtype=jnp.int32)

    # torch-style Linear weights, stored pre-transposed as (in_features, out_features).
    b1 = 1.0 / np.sqrt(C)
    b2 = 1.0 / np.sqrt(CR)
    w1 = jax.random.uniform(k1, (C, CR), jnp.float32, minval=-b1, maxval=b1)
    w2 = jax.random.uniform(k2, (CR, C), jnp.float32, minval=-b2, maxval=b2)

    out = flatten_se_layer(x, indices, w1, w2,
                           num_segments=NUM_SEGMENTS, tile_points=TILE_POINTS)
    out = jax.block_until_ready(out)

    ref = _reference(x, indices, w1, w2, NUM_SEGMENTS)
    np.testing.assert_allclose(np.asarray(out), np.asarray(ref),
                               rtol=1e-4, atol=1e-5)
    print("KERNEL_OK")
</pallas_src>

<mosaic_0001>
module attributes {stable_mosaic.version = 11 : i64} {
  func.func @kernel(%arg0: i32, %arg1: i32, %arg2: memref<8x128xbf16, #tpu.memory_space<vmem>>, %arg3: memref<32x128xf32, #tpu.memory_space<vmem>>, %arg4: memref<32x8xi32, #tpu.memory_space<vmem>>, %arg5: memref<1x4x128xf32, #tpu.memory_space<vmem>>, %arg6: memref<1x4x8xf32, #tpu.memory_space<vmem>>) attributes {dimension_semantics = [#tpu.dimension_semantics<parallel>, #tpu.dimension_semantics<arbitrary>], iteration_bounds = array<i64: 2, 2>, scalar_prefetch = 0 : i64, scratch_operands = 0 : i64, tpu.core_type = #tpu.core_type<tc>, window_params = [{pipeline_mode = #tpu.pipeline_mode<synchronous>, transform_indices = @transform_0, window_bounds = array<i64: 8, 128>}, {transform_indices = @transform_1, window_bounds = array<i64: 32, 128>}, {transform_indices = @transform_2, window_bounds = array<i64: 32, 8>}, {transform_indices = @transform_3, window_bounds = array<i64: 1, 4, 128>}, {transform_indices = @transform_4, window_bounds = array<i64: 1, 4, 8>}]} {
    %c0_i32 = arith.constant 0 : i32
    %0 = arith.cmpi eq, %arg1, %c0_i32 : i32
    %1 = arith.extui %0 : i1 to i32
    %c0_i32_0 = arith.constant 0 : i32
    %2 = arith.cmpi ne, %1, %c0_i32_0 : i32
    scf.if %2 {
      %cst_68 = arith.constant 0.000000e+00 : f32
      %104 = vector.broadcast %cst_68 : f32 to vector<4x128xf32>
      %c0_69 = arith.constant 0 : index
      %c0_70 = arith.constant 0 : index
      %c0_71 = arith.constant 0 : index
      %105 = vector.load %arg5[%c0_69, %c0_70, %c0_71] : memref<1x4x128xf32, #tpu.memory_space<vmem>>, vector<1x4x128xf32>
      %106 = vector.shape_cast %105 : vector<1x4x128xf32> to vector<4x128xf32>
      %107 = vector.shape_cast %104 : vector<4x128xf32> to vector<1x4x128xf32>
      tpu.vector_store %arg5[%c0_69, %c0_70, %c0_71], %107 {strides = array<i32>} : memref<1x4x128xf32, #tpu.memory_space<vmem>>, vector<1x4x128xf32>,
      %cst_72 = arith.constant 0.000000e+00 : f32
      %108 = vector.broadcast %cst_72 : f32 to vector<4x8xf32>
      %c0_73 = arith.constant 0 : index
      %c0_74 = arith.constant 0 : index
      %c0_75 = arith.constant 0 : index
      %109 = vector.load %arg6[%c0_73, %c0_74, %c0_75] : memref<1x4x8xf32, #tpu.memory_space<vmem>>, vector<1x4x8xf32>
      %110 = vector.shape_cast %109 : vector<1x4x8xf32> to vector<4x8xf32>
      %111 = vector.shape_cast %108 : vector<4x8xf32> to vector<1x4x8xf32>
      tpu.vector_store %arg6[%c0_73, %c0_74, %c0_75], %111 {strides = array<i32>} : memref<1x4x8xf32, #tpu.memory_space<vmem>>, vector<1x4x8xf32>,
    } else {
    }
    %c0 = arith.constant 0 : index
    %c0_1 = arith.constant 0 : index
    %3 = vector.load %arg3[%c0, %c0_1] : memref<32x128xf32, #tpu.memory_space<vmem>>, vector<32x128xf32>
    %c0_2 = arith.constant 0 : index
    %c0_3 = arith.constant 0 : index
    %4 = vector.load %arg4[%c0_2, %c0_3] : memref<32x8xi32, #tpu.memory_space<vmem>>, vector<32x8xi32>
    %5 = arith.sitofp %4 : vector<32x8xi32> to vector<32x8xbf16>
    %c0_4 = arith.constant 0 : index
    %c0_5 = arith.constant 0 : index
    %6 = vector.load %arg2[%c0_4, %c0_5] : memref<8x128xbf16, #tpu.memory_space<vmem>>, vector<8x128xbf16>
    %cst = arith.constant dense<0.000000e+00> : vector<32x128xf32>
    %7 = tpu.matmul %5, %6, %cst {dimension_numbers = #tpu.dot_dimension_numbers<[1], [0], [0], [1], [0, 0, 1, 1], [], []>} : vector<32x8xbf16>, vector<8x128xbf16>, vector<32x128xf32> -> vector<32x128xf32>
    %cst_6 = arith.constant 0.000000e+00 : f32
    %8 = vector.broadcast %cst_6 : f32 to vector<32x128xf32>
    %9 = arith.cmpf oeq, %7, %8 : vector<32x128xf32>
    %cst_7 = arith.constant 0.000000e+00 : f32
    %10 = vector.broadcast %cst_7 : f32 to vector<32x128xf32>
    %11 = arith.select %9, %3, %10 : vector<32x128xi1>, vector<32x128xf32>
    %cst_8 = arith.constant dense<0.000000e+00> : vector<128xf32>
    %12 = vector.multi_reduction <add>, %11, %cst_8 [0] : vector<32x128xf32> to vector<128xf32>
    %13 = vector.shape_cast %12 : vector<128xf32> to vector<1x128xf32>
    %c0_9 = arith.constant 0 : index
    %c0_10 = arith.constant 0 : index
    %c0_11 = arith.constant 0 : index
    %14 = vector.load %arg5[%c0_9, %c0_10, %c0_11] : memref<1x4x128xf32, #tpu.memory_space<vmem>>, vector<1x1x128xf32>
    %15 = vector.shape_cast %14 : vector<1x1x128xf32> to vector<1x128xf32>
    %16 = arith.addf %15, %13 : vector<1x128xf32>
    %c0_12 = arith.constant 0 : index
    %c0_13 = arith.constant 0 : index
    %c0_14 = arith.constant 0 : index
    %17 = vector.load %arg5[%c0_12, %c0_13, %c0_14] : memref<1x4x128xf32, #tpu.memory_space<vmem>>, vector<1x1x128xf32>
    %18 = vector.shape_cast %17 : vector<1x1x128xf32> to vector<1x128xf32>
    %19 = vector.shape_cast %16 : vector<1x128xf32> to vector<1x1x128xf32>
    tpu.vector_store %arg5[%c0_12, %c0_13, %c0_14], %19 {strides = array<i32>} : memref<1x4x128xf32, #tpu.memory_space<vmem>>, vector<1x1x128xf32>,
    %c0_i32_15 = arith.constant 0 : i32
    %20 = vector.broadcast %c0_i32_15 : i32 to vector<32x8xi32>
    %21 = arith.cmpi eq, %4, %20 : vector<32x8xi32>
    %22 = arith.extui %21 : vector<32x8xi1> to vector<32x8xi32>
    %23 = arith.sitofp %22 : vector<32x8xi32> to vector<32x8xf32>
    %cst_16 = arith.constant dense<0.000000e+00> : vector<8xf32>
    %24 = vector.multi_reduction <add>, %23, %cst_16 [0] : vector<32x8xf32> to vector<8xf32>
    %25 = vector.shape_cast %24 : vector<8xf32> to vector<1x8xf32>
    %c0_17 = arith.constant 0 : index
    %c0_18 = arith.constant 0 : index
    %c0_19 = arith.constant 0 : index
    %26 = vector.load %arg6[%c0_17, %c0_18, %c0_19] : memref<1x4x8xf32, #tpu.memory_space<vmem>>, vector<1x1x8xf32>
    %27 = vector.shape_cast %26 : vector<1x1x8xf32> to vector<1x8xf32>
    %28 = arith.addf %27, %25 : vector<1x8xf32>
    %c0_20 = arith.constant 0 : index
    %c0_21 = arith.constant 0 : index
    %c0_22 = arith.constant 0 : index
    %29 = vector.load %arg6[%c0_20, %c0_21, %c0_22] : memref<1x4x8xf32, #tpu.memory_space<vmem>>, vector<1x1x8xf32>
    %30 = vector.shape_cast %29 : vector<1x1x8xf32> to vector<1x8xf32>
    %31 = vector.shape_cast %28 : vector<1x8xf32> to vector<1x1x8xf32>
    tpu.vector_store %arg6[%c0_20, %c0_21, %c0_22], %31 {strides = array<i32>} : memref<1x4x8xf32, #tpu.memory_space<vmem>>, vector<1x1x8xf32>,
    %cst_23 = arith.constant 1.000000e+00 : f32
    %32 = vector.broadcast %cst_23 : f32 to vector<32x128xf32>
    %33 = arith.cmpf oeq, %7, %32 : vector<32x128xf32>
    %cst_24 = arith.constant 0.000000e+00 : f32
    %34 = vector.broadcast %cst_24 : f32 to vector<32x128xf32>
    %35 = arith.select %33, %3, %34 : vector<32x128xi1>, vector<32x128xf32>
    %cst_25 = arith.constant dense<0.000000e+00> : vector<128xf32>
    %36 = vector.multi_reduction <add>, %35, %cst_25 [0] : vector<32x128xf32> to vector<128xf32>
    %37 = vector.shape_cast %36 : vector<128xf32> to vector<1x128xf32>
    %c0_26 = arith.constant 0 : index
    %c1 = arith.constant 1 : index
    %c0_27 = arith.constant 0 : index
    %38 = vector.load %arg5[%c0_26, %c1, %c0_27] : memref<1x4x128xf32, #tpu.memory_space<vmem>>, vector<1x1x128xf32>
    %39 = vector.shape_cast %38 : vector<1x1x128xf32> to vector<1x128xf32>
    %40 = arith.addf %39, %37 : vector<1x128xf32>
    %c0_28 = arith.constant 0 : index
    %c1_29 = arith.constant 1 : index
    %c0_30 = arith.constant 0 : index
    %41 = vector.load %arg5[%c0_28, %c1_29, %c0_30] : memref<1x4x128xf32, #tpu.memory_space<vmem>>, vector<1x1x128xf32>
    %42 = vector.shape_cast %41 : vector<1x1x128xf32> to vector<1x128xf32>
    %43 = vector.shape_cast %40 : vector<1x128xf32> to vector<1x1x128xf32>
    tpu.vector_store %arg5[%c0_28, %c1_29, %c0_30], %43 {strides = array<i32>} : memref<1x4x128xf32, #tpu.memory_space<vmem>>, vector<1x1x128xf32>,
    %c1_i32 = arith.constant 1 : i32
    %44 = vector.broadcast %c1_i32 : i32 to vector<32x8xi32>
    %45 = arith.cmpi eq, %4, %44 : vector<32x8xi32>
    %46 = arith.extui %45 : vector<32x8xi1> to vector<32x8xi32>
    %47 = arith.sitofp %46 : vector<32x8xi32> to vector<32x8xf32>
    %cst_31 = arith.constant dense<0.000000e+00> : vector<8xf32>
    %48 = vector.multi_reduction <add>, %47, %cst_31 [0] : vector<32x8xf32> to vector<8xf32>
    %49 = vector.shape_cast %48 : vector<8xf32> to vector<1x8xf32>
    %c0_32 = arith.constant 0 : index
    %c1_33 = arith.constant 1 : index
    %c0_34 = arith.constant 0 : index
    %50 = vector.load %arg6[%c0_32, %c1_33, %c0_34] : memref<1x4x8xf32, #tpu.memory_space<vmem>>, vector<1x1x8xf32>
    %51 = vector.shape_cast %50 : vector<1x1x8xf32> to vector<1x8xf32>
    %52 = arith.addf %51, %49 : vector<1x8xf32>
    %c0_35 = arith.constant 0 : index
    %c1_36 = arith.constant 1 : index
    %c0_37 = arith.constant 0 : index
    %53 = vector.load %arg6[%c0_35, %c1_36, %c0_37] : memref<1x4x8xf32, #tpu.memory_space<vmem>>, vector<1x1x8xf32>
    %54 = vector.shape_cast %53 : vector<1x1x8xf32> to vector<1x8xf32>
    %55 = vector.shape_cast %52 : vector<1x8xf32> to vector<1x1x8xf32>
    tpu.vector_store %arg6[%c0_35, %c1_36, %c0_37], %55 {strides = array<i32>} : memref<1x4x8xf32, #tpu.memory_space<vmem>>, vector<1x1x8xf32>,
    %cst_38 = arith.constant 2.000000e+00 : f32
    %56 = vector.broadcast %cst_38 : f32 to vector<32x128xf32>
    %57 = arith.cmpf oeq, %7, %56 : vector<32x128xf32>
    %cst_39 = arith.constant 0.000000e+00 : f32
    %58 = vector.broadcast %cst_39 : f32 to vector<32x128xf32>
    %59 = arith.select %57, %3, %58 : vector<32x128xi1>, vector<32x128xf32>
    %cst_40 = arith.constant dense<0.000000e+00> : vector<128xf32>
    %60 = vector.multi_reduction <add>, %59, %cst_40 [0] : vector<32x128xf32> to vector<128xf32>
    %61 = vector.shape_cast %60 : vector<128xf32> to vector<1x128xf32>
    %c0_41 = arith.constant 0 : index
    %c2 = arith.constant 2 : index
    %c0_42 = arith.constant 0 : index
    %62 = vector.load %arg5[%c0_41, %c2, %c0_42] : memref<1x4x128xf32, #tpu.memory_space<vmem>>, vector<1x1x128xf32>
    %63 = vector.shape_cast %62 : vector<1x1x128xf32> to vector<1x128xf32>
    %64 = arith.addf %63, %61 : vector<1x128xf32>
    %c0_43 = arith.constant 0 : index
    %c2_44 = arith.constant 2 : index
    %c0_45 = arith.constant 0 : index
    %65 = vector.load %arg5[%c0_43, %c2_44, %c0_45] : memref<1x4x128xf32, #tpu.memory_space<vmem>>, vector<1x1x128xf32>
    %66 = vector.shape_cast %65 : vector<1x1x128xf32> to vector<1x128xf32>
    %67 = vector.shape_cast %64 : vector<1x128xf32> to vector<1x1x128xf32>
    tpu.vector_store %arg5[%c0_43, %c2_44, %c0_45], %67 {strides = array<i32>} : memref<1x4x128xf32, #tpu.memory_space<vmem>>, vector<1x1x128xf32>,
    %c2_i32 = arith.constant 2 : i32
    %68 = vector.broadcast %c2_i32 : i32 to vector<32x8xi32>
    %69 = arith.cmpi eq, %4, %68 : vector<32x8xi32>
    %70 = arith.extui %69 : vector<32x8xi1> to vector<32x8xi32>
    %71 = arith.sitofp %70 : vector<32x8xi32> to vector<32x8xf32>
    %cst_46 = arith.constant dense<0.000000e+00> : vector<8xf32>
    %72 = vector.multi_reduction <add>, %71, %cst_46 [0] : vector<32x8xf32> to vector<8xf32>
    %73 = vector.shape_cast %72 : vector<8xf32> to vector<1x8xf32>
    %c0_47 = arith.constant 0 : index
    %c2_48 = arith.constant 2 : index
    %c0_49 = arith.constant 0 : index
    %74 = vector.load %arg6[%c0_47, %c2_48, %c0_49] : memref<1x4x8xf32, #tpu.memory_space<vmem>>, vector<1x1x8xf32>
    %75 = vector.shape_cast %74 : vector<1x1x8xf32> to vector<1x8xf32>
    %76 = arith.addf %75, %73 : vector<1x8xf32>
    %c0_50 = arith.constant 0 : index
    %c2_51 = arith.constant 2 : index
    %c0_52 = arith.constant 0 : index
    %77 = vector.load %arg6[%c0_50, %c2_51, %c0_52] : memref<1x4x8xf32, #tpu.memory_space<vmem>>, vector<1x1x8xf32>
    %78 = vector.shape_cast %77 : vector<1x1x8xf32> to vector<1x8xf32>
    %79 = vector.shape_cast %76 : vector<1x8xf32> to vector<1x1x8xf32>
    tpu.vector_store %arg6[%c0_50, %c2_51, %c0_52], %79 {strides = array<i32>} : memref<1x4x8xf32, #tpu.memory_space<vmem>>, vector<1x1x8xf32>,
    %cst_53 = arith.constant 3.000000e+00 : f32
    %80 = vector.broadcast %cst_53 : f32 to vector<32x128xf32>
    %81 = arith.cmpf oeq, %7, %80 : vector<32x128xf32>
    %cst_54 = arith.constant 0.000000e+00 : f32
    %82 = vector.broadcast %cst_54 : f32 to vector<32x128xf32>
    %83 = arith.select %81, %3, %82 : vector<32x128xi1>, vector<32x128xf32>
    %cst_55 = arith.constant dense<0.000000e+00> : vector<128xf32>
    %84 = vector.multi_reduction <add>, %83, %cst_55 [0] : vector<32x128xf32> to vector<128xf32>
    %85 = vector.shape_cast %84 : vector<128xf32> to vector<1x128xf32>
    %c0_56 = arith.constant 0 : index
    %c3 = arith.constant 3 : index
    %c0_57 = arith.constant 0 : index
    %86 = vector.load %arg5[%c0_56, %c3, %c0_57] : memref<1x4x128xf32, #tpu.memory_space<vmem>>, vector<1x1x128xf32>
    %87 = vector.shape_cast %86 : vector<1x1x128xf32> to vector<1x128xf32>
    %88 = arith.addf %87, %85 : vector<1x128xf32>
    %c0_58 = arith.constant 0 : index
    %c3_59 = arith.constant 3 : index
    %c0_60 = arith.constant 0 : index
    %89 = vector.load %arg5[%c0_58, %c3_59, %c0_60] : memref<1x4x128xf32, #tpu.memory_space<vmem>>, vector<1x1x128xf32>
    %90 = vector.shape_cast %89 : vector<1x1x128xf32> to vector<1x128xf32>
    %91 = vector.shape_cast %88 : vector<1x128xf32> to vector<1x1x128xf32>
    tpu.vector_store %arg5[%c0_58, %c3_59, %c0_60], %91 {strides = array<i32>} : memref<1x4x128xf32, #tpu.memory_space<vmem>>, vector<1x1x128xf32>,
    %c3_i32 = arith.constant 3 : i32
    %92 = vector.broadcast %c3_i32 : i32 to vector<32x8xi32>
    %93 = arith.cmpi eq, %4, %92 : vector<32x8xi32>
    %94 = arith.extui %93 : vector<32x8xi1> to vector<32x8xi32>
    %95 = arith.sitofp %94 : vector<32x8xi32> to vector<32x8xf32>
    %cst_61 = arith.constant dense<0.000000e+00> : vector<8xf32>
    %96 = vector.multi_reduction <add>, %95, %cst_61 [0] : vector<32x8xf32> to vector<8xf32>
    %97 = vector.shape_cast %96 : vector<8xf32> to vector<1x8xf32>
    %c0_62 = arith.constant 0 : index
    %c3_63 = arith.constant 3 : index
    %c0_64 = arith.constant 0 : index
    %98 = vector.load %arg6[%c0_62, %c3_63, %c0_64] : memref<1x4x8xf32, #tpu.memory_space<vmem>>, vector<1x1x8xf32>
    %99 = vector.shape_cast %98 : vector<1x1x8xf32> to vector<1x8xf32>
    %100 = arith.addf %99, %97 : vector<1x8xf32>
    %c0_65 = arith.constant 0 : index
    %c3_66 = arith.constant 3 : index
    %c0_67 = arith.constant 0 : index
    %101 = vector.load %arg6[%c0_65, %c3_66, %c0_67] : memref<1x4x8xf32, #tpu.memory_space<vmem>>, vector<1x1x8xf32>
    %102 = vector.shape_cast %101 : vector<1x1x8xf32> to vector<1x8xf32>
    %103 = vector.shape_cast %100 : vector<1x8xf32> to vector<1x1x8xf32>
    tpu.vector_store %arg6[%c0_65, %c3_66, %c0_67], %103 {strides = array<i32>} : memref<1x4x8xf32, #tpu.memory_space<vmem>>, vector<1x1x8xf32>,
    return
  }
  func.func @transform_0(%arg0: i32, %arg1: i32) -> (i32, i32) {
    %c0_i32 = arith.constant 0 : i32
    %c0_i32_0 = arith.constant 0 : i32
    %c0_i32_1 = arith.constant 0 : i32
    return %c0_i32, %c0_i32_0 : i32, i32
  }
  func.func @transform_1(%arg0: i32, %arg1: i32) -> (i32, i32) {
    %c2_i32 = arith.constant 2 : i32
    %0 = arith.muli %arg0, %c2_i32 : i32
    %1 = arith.addi %0, %arg1 : i32
    %c3_i32 = arith.constant 3 : i32
    %2 = arith.minsi %1, %c3_i32 : i32
    %c0_i32 = arith.constant 0 : i32
    %c0_i32_0 = arith.constant 0 : i32
    return %2, %c0_i32 : i32, i32
  }
  func.func @transform_2(%arg0: i32, %arg1: i32) -> (i32, i32) {
    %c2_i32 = arith.constant 2 : i32
    %0 = arith.muli %arg0, %c2_i32 : i32
    %1 = arith.addi %0, %arg1 : i32
    %c0_i32 = arith.constant 0 : i32
    %c0_i32_0 = arith.constant 0 : i32
    return %1, %c0_i32 : i32, i32
  }
  func.func @transform_3(%arg0: i32, %arg1: i32) -> (i32, i32, i32) {
    %c0_i32 = arith.constant 0 : i32
    %c0_i32_0 = arith.constant 0 : i32
    %c0_i32_1 = arith.constant 0 : i32
    return %arg0, %c0_i32, %c0_i32_0 : i32, i32, i32
  }
  func.func @transform_4(%arg0: i32, %arg1: i32) -> (i32, i32, i32) {
    %c0_i32 = arith.constant 0 : i32
    %c0_i32_0 = arith.constant 0 : i32
    %c0_i32_1 = arith.constant 0 : i32
    return %arg0, %c0_i32, %c0_i32_0 : i32, i32, i32
  }
}

module attributes {stable_mosaic.version = 11 : i64} {
  func.func @_apply_kernel(%arg0: i32, %arg1: memref<8x32xbf16, #tpu.memory_space<vmem>>, %arg2: memref<1x32xf32, #tpu.memory_space<vmem>>, %arg3: memref<32x128xbf16, #tpu.memory_space<vmem>>, %arg4: memref<32x128xbf16, #tpu.memory_space<vmem>>, %arg5: memref<32x128xf32, #tpu.memory_space<vmem>>, %arg6: memref<32x8xi32, #tpu.memory_space<vmem>>, %arg7: memref<32x128xf32, #tpu.memory_space<vmem>>) attributes {dimension_semantics = [#tpu.dimension_semantics<parallel>], iteration_bounds = array<i64: 4>, scalar_prefetch = 0 : i64, scratch_operands = 0 : i64, tpu.core_type = #tpu.core_type<tc>, window_params = [{pipeline_mode = #tpu.pipeline_mode<synchronous>, transform_indices = @transform_0, window_bounds = array<i64: 8, 32>}, {pipeline_mode = #tpu.pipeline_mode<synchronous>, transform_indices = @transform_1, window_bounds = array<i64: 1, 32>}, {pipeline_mode = #tpu.pipeline_mode<synchronous>, transform_indices = @transform_2, window_bounds = array<i64: 32, 128>}, {pipeline_mode = #tpu.pipeline_mode<synchronous>, transform_indices = @transform_3, window_bounds = array<i64: 32, 128>}, {transform_indices = @transform_4, window_bounds = array<i64: 32, 128>}, {transform_indices = @transform_5, window_bounds = array<i64: 32, 8>}, {transform_indices = @transform_6, window_bounds = array<i64: 32, 128>}]} {
    %c0 = arith.constant 0 : index
    %c0_0 = arith.constant 0 : index
    %0 = vector.load %arg6[%c0, %c0_0] : memref<32x8xi32, #tpu.memory_space<vmem>>, vector<32x8xi32>
    %1 = arith.sitofp %0 : vector<32x8xi32> to vector<32x8xbf16>
    %c0_1 = arith.constant 0 : index
    %c0_2 = arith.constant 0 : index
    %2 = vector.load %arg1[%c0_1, %c0_2] : memref<8x32xbf16, #tpu.memory_space<vmem>>, vector<8x32xbf16>
    %cst = arith.constant dense<0.000000e+00> : vector<32x32xf32>
    %3 = tpu.matmul %1, %2, %cst {dimension_numbers = #tpu.dot_dimension_numbers<[1], [0], [0], [1], [0, 0, 1, 1], [], []>} : vector<32x8xbf16>, vector<8x32xbf16>, vector<32x32xf32> -> vector<32x32xf32>
    %c0_3 = arith.constant 0 : index
    %c0_4 = arith.constant 0 : index
    %4 = vector.load %arg2[%c0_3, %c0_4] : memref<1x32xf32, #tpu.memory_space<vmem>>, vector<1x32xf32>
    %5 = vector.broadcast %4 : vector<1x32xf32> to vector<32x32xf32>
    %6 = arith.cmpf oeq, %3, %5 : vector<32x32xf32>
    %7 = arith.extui %6 : vector<32x32xi1> to vector<32x32xi32>
    %8 = arith.sitofp %7 : vector<32x32xi32> to vector<32x32xf32>
    %9 = arith.truncf %8 : vector<32x32xf32> to vector<32x32xbf16>
    %c0_5 = arith.constant 0 : index
    %c0_6 = arith.constant 0 : index
    %10 = vector.load %arg3[%c0_5, %c0_6] : memref<32x128xbf16, #tpu.memory_space<vmem>>, vector<32x128xbf16>
    %cst_7 = arith.constant dense<0.000000e+00> : vector<32x128xf32>
    %11 = tpu.matmul %9, %10, %cst_7 {dimension_numbers = #tpu.dot_dimension_numbers<[1], [0], [0], [1], [0, 0, 1, 1], [], []>} : vector<32x32xbf16>, vector<32x128xbf16>, vector<32x128xf32> -> vector<32x128xf32>
    %c0_8 = arith.constant 0 : index
    %c0_9 = arith.constant 0 : index
    %12 = vector.load %arg4[%c0_8, %c0_9] : memref<32x128xbf16, #tpu.memory_space<vmem>>, vector<32x128xbf16>
    %cst_10 = arith.constant dense<0.000000e+00> : vector<32x128xf32>
    %13 = tpu.matmul %9, %12, %cst_10 {dimension_numbers = #tpu.dot_dimension_numbers<[1], [0], [0], [1], [0, 0, 1, 1], [], []>} : vector<32x32xbf16>, vector<32x128xbf16>, vector<32x128xf32> -> vector<32x128xf32>
    %14 = arith.addf %11, %13 : vector<32x128xf32>
    %c0_11 = arith.constant 0 : index
    %c0_12 = arith.constant 0 : index
    %15 = vector.load %arg5[%c0_11, %c0_12] : memref<32x128xf32, #tpu.memory_space<vmem>>, vector<32x128xf32>
    %16 = arith.mulf %15, %14 : vector<32x128xf32>
    %c0_13 = arith.constant 0 : index
    %c0_14 = arith.constant 0 : index
    %17 = vector.load %arg7[%c0_13, %c0_14] : memref<32x128xf32, #tpu.memory_space<vmem>>, vector<32x128xf32>
    tpu.vector_store %arg7[%c0_13, %c0_14], %16 {strides = array<i32>} : memref<32x128xf32, #tpu.memory_space<vmem>>, vector<32x128xf32>,
    return
  }
  func.func @transform_0(%arg0: i32) -> (i32, i32) {
    %c0_i32 = arith.constant 0 : i32
    %c0_i32_0 = arith.constant 0 : i32
    %c0_i32_1 = arith.constant 0 : i32
    return %c0_i32, %c0_i32_0 : i32, i32
  }
  func.func @transform_1(%arg0: i32) -> (i32, i32) {
    %c0_i32 = arith.constant 0 : i32
    %c0_i32_0 = arith.constant 0 : i32
    %c0_i32_1 = arith.constant 0 : i32
    return %c0_i32, %c0_i32_0 : i32, i32
  }
  func.func @transform_2(%arg0: i32) -> (i32, i32) {
    %c0_i32 = arith.constant 0 : i32
    %c0_i32_0 = arith.constant 0 : i32
    %c0_i32_1 = arith.constant 0 : i32
    return %c0_i32, %c0_i32_0 : i32, i32
  }
  func.func @transform_3(%arg0: i32) -> (i32, i32) {
    %c0_i32 = arith.constant 0 : i32
    %c0_i32_0 = arith.constant 0 : i32
    %c0_i32_1 = arith.constant 0 : i32
    return %c0_i32, %c0_i32_0 : i32, i32
  }
  func.func @transform_4(%arg0: i32) -> (i32, i32) {
    %c0_i32 = arith.constant 0 : i32
    %c0_i32_0 = arith.constant 0 : i32
    return %arg0, %c0_i32 : i32, i32
  }
  func.func @transform_5(%arg0: i32) -> (i32, i32) {
    %c0_i32 = arith.constant 0 : i32
    %c0_i32_0 = arith.constant 0 : i32
    return %arg0, %c0_i32 : i32, i32
  }
  func.func @transform_6(%arg0: i32) -> (i32, i32) {
    %c0_i32 = arith.constant 0 : i32
    %c0_i32_0 = arith.constant 0 : i32
    return %arg0, %c0_i32 : i32, i32
  }
}

</mosaic_0001>

<llo_original>
// kernel: tile.9
$region0: #{tile.9}
  %s0 = inlined_call_operand.vmem [shape: f32[4,8,16], index: 0, kind: input, shape index: {}]
  %s1 = inlined_call_operand.vmem [shape: f32[4,128], index: 1, kind: output, shape index: {}]
  $region1: #{tile.9} parent=0
    #allocation0 [shape = 'u8[4096]{0}', space=vmem, size = 0x1000, scoped, tag = 'scoped mem for output reshape']
    %v2 = vld [vmem:[%s0] ss:$8 sm:$0xf]
    %vm3 = vcmask 130048
    %4 = vst.msk [vmem:[#allocation0] sm:$0xf] %vm3, %v2
    %s5 = scalar_lea.vmem %s0, 7
    %v6 = vld [vmem:[%s5] ss:$8 sm:$0xf]
    %7 = vrot.lane.b32.xlu0 %v6, 112
    %v8 = vpop.permute.xlu0 %7
    %vm9 = vcmask 1048448
    %10 = vst.msk [vmem:[#allocation0] sm:$0xf] %vm9, %v8
    %s11 = scalar_lea.vmem %s0, 6
    %v12 = vld [vmem:[%s11] ss:$8 sm:$0xf]
    %13 = vrot.lane.b32.xlu0 %v12, 96
    %v14 = vpop.permute.xlu0 %13
    %vm15 = vcmask 917248
    %16 = vst.msk [vmem:[#allocation0] sm:$0xf] %vm15, %v14
    %s17 = scalar_lea.vmem %s0, 5
    %v18 = vld [vmem:[%s17] ss:$8 sm:$0xf]
    %19 = vrot.lane.b32.xlu0 %v18, 80
    %v20 = vpop.permute.xlu0 %19
    %vm21 = vcmask 786048
    %22 = vst.msk [vmem:[#allocation0] sm:$0xf] %vm21, %v20
    %s23 = scalar_lea.vmem %s0, 4
    %v24 = vld [vmem:[%s23] ss:$8 sm:$0xf]
    %25 = vrot.lane.b32.xlu0 %v24, 64
    %v26 = vpop.permute.xlu0 %25
    %vm27 = vcmask 654848
    %28 = vst.msk [vmem:[#allocation0] sm:$0xf] %vm27, %v26
    %s29 = scalar_lea.vmem %s0, 3
    %v30 = vld [vmem:[%s29] ss:$8 sm:$0xf]
    %31 = vrot.lane.b32.xlu0 %v30, 48
    %v32 = vpop.permute.xlu0 %31
    %vm33 = vcmask 523648
    %34 = vst.msk [vmem:[#allocation0] sm:$0xf] %vm33, %v32
    %s35 = scalar_lea.vmem %s0, 2
    %v36 = vld [vmem:[%s35] ss:$8 sm:$0xf]
    %37 = vrot.lane.b32.xlu0 %v36, 32
    %v38 = vpop.permute.xlu0 %37
    %vm39 = vcmask 392448
    %40 = vst.msk [vmem:[#allocation0] sm:$0xf] %vm39, %v38
    %s41 = scalar_lea.vmem %s0, 1
    %v42 = vld [vmem:[%s41] ss:$8 sm:$0xf]
    %43 = vrot.lane.b32.xlu0 %v42, 16
    %v44 = vpop.permute.xlu0 %43
    %vm45 = vcmask 261248
    %46 = vst.msk [vmem:[#allocation0] sm:$0xf] %vm45, %v44
    %s48 = sshllo.u32 0, 4
    %v50 = vld [vmem:[#allocation0] sm:%s48]
    %s51 = sshllo.u32 0, 4
    %52 = vst [vmem:[%s1] sm:%s51] %v50

// kernel: flatten_se_layer.2
$region0: #{flatten_se_layer.2}
  #allocation0 [shape = 'u32[]', space=smem, size = 0x4, offset = 0x4, fixed_abs, tag = 'smem constant byte address 0x4 - core index']
  #allocation1 [shape = 'u32[144,128]{1,0:T(1,128)}', space=vmem, size = 0x12000, scoped, tag = 'internal scratch']
  %s0 = inlined_call_operand.vmem [shape: bf16[8,128], index: 0, kind: input, shape index: {}]
  %s1 = inlined_call_operand.vmem [shape: f32[128,128], index: 1, kind: input, shape index: {}]
  %s2 = inlined_call_operand.vmem [shape: s32[128,8], index: 2, kind: input, shape index: {}]
  %s3 = inlined_call_operand.vmem [shape: f32[2,4,128], index: 3, kind: output, shape index: {0}]
  %s4 = inlined_call_operand.vmem [shape: f32[2,4,8], index: 4, kind: output, shape index: {1}]
  %5 = xla_tuple %s3, %s4
  %s6 = sld [smem:[#allocation0]]
  $region57: #{flatten_se_layer.2} parent=0
    _
  %s8 = ssub.s32 1, %s6
  %s9 = scalar_select 0, %s8, %s6
  loop: start=0, step=1, limit=6
  $region2: #{flatten_se_layer.2} parent=0 // loop_pre_header
    _
  $region3: #{flatten_se_layer.2} parent=0 // loop_header
    %s11 = sphi 0, %s15
    %p12 = scmp.ge.s32.totalorder %s11, 6
    %s18 = sphi 0, %s30
    %s19 = sphi 0, %s26
    %s20 = sphi 0, %s18
    %s21 = sphi 0, %s19
    %s22 = sphi 0, %s20
    %s23 = sphi 0, %s21
    %s31 = sphi 0, %s31
    %s33 = sphi 0, %s31
    %s34 = sphi 0, %s33
    %s48 = sphi 0, %s34
    %s62 = sphi 0, %s64
    %s65 = sphi 0, %s62
    %s66 = sphi 0, %s65
    %s82 = sphi 0, %s66
    %s92 = sphi 0, %s94
    %s95 = sphi 0, %s92
    %s96 = sphi 0, %s95
    %s112 = sphi 0, %s96
    %s118 = sphi 0, %s120
    %s121 = sphi 0, %s118
    %s122 = sphi 0, %s121
    %s138 = sphi 0, %s122
    %s144 = sphi 0, %s146
    %s147 = sphi 0, %s144
    %s148 = sphi 0, %s147
    %s164 = sphi 0, %s148
  $region4: #{flatten_se_layer.2} parent=0 // loop_header_branch
    %14 = sbr.rel (%p12) target = $region8
  $region5: #{flatten_se_layer.2} parent=0 // loop_body
    %s16 = ssub.s32 %s11, 1
    %s17 = ssub.s32 %s11, 2
    %s24 = sadd.s32 1, %s19
    %p25 = scmp.ge.s32.totalorder %s24, 2
    %s26 = scalar_select %p25, 0, %s24
    %s27 = sadd.s32 1, %s18
    %s28 = scalar_select %p25, %s27, %s18
    %p29 = scmp.ge.s32.totalorder %s28, 2
    %s30 = scalar_select %p29, 0, %s28
    %s32 = sadd.s32 %s31, 1
    %p35 = scmp.eq.s32.totalorder %s11, 3
    %p36 = scmp.ne.s32.totalorder %s31, %s33
    %p37 = scmp.eq.s32.totalorder %s11, 0
    %p38 = por %p36, %p37
    %p39 = scmp.ne.s32.totalorder %s31, %s33
    %p40 = scmp.eq.s32.totalorder %s16, 3
    %p41 = por %p39, %p40
    %p42 = scmp.ne.s32.totalorder %s33, %s34
    %p43 = scmp.eq.s32.totalorder %s16, 0
    %p44 = por %p42, %p43
    %p45 = scmp.ne.s32.totalorder %s33, %s34
    %p46 = scmp.eq.s32.totalorder %s17, 3
    %p47 = por %p45, %p46
    %p49 = scmp.ne.s32.totalorder %s34, %s48
    %p50 = scmp.eq.s32.totalorder %s17, 0
    %p51 = por %p49, %p50
    %s52 = smul.u32 %s18, 2
    %s53 = sadd.s32 %s52, %s19
    %p54 = scmp.lt.s32.totalorder %s53, 3
    %s55 = scalar_select %p54, %s53, 3
    %s56 = smul.u32 %s30, 2
    %s57 = sadd.s32 %s56, %s26
    %p58 = scmp.lt.s32.totalorder %s57, 3
    %s59 = scalar_select %p58, %s57, 3
    %s60 = ssub.s32 %s55, %s59
    %p61 = scmp.eq.s32.totalorder %s60, 0
    %s63 = sadd.s32 %s62, 1
    %s64 = scalar_select %p61, %s62, %s63
    %p67 = pneg %p61
    %p68 = scmp.eq.s32.totalorder %s11, 3
    %p69 = por %p67, %p68
    %p70 = scmp.ne.s32.totalorder %s62, %s65
    %p71 = scmp.eq.s32.totalorder %s11, 0
    %p72 = por %p70, %p71
    %p73 = scmp.ne.s32.totalorder %s62, %s65
    %p74 = scmp.eq.s32.totalorder %s16, 3
    %p75 = por %p73, %p74
    %p76 = scmp.ne.s32.totalorder %s65, %s66
    %p77 = scmp.eq.s32.totalorder %s16, 0
    %p78 = por %p76, %p77
    %p79 = scmp.ne.s32.totalorder %s65, %s66
    %p80 = scmp.eq.s32.totalorder %s17, 3
    %p81 = por %p79, %p80
    %p83 = scmp.ne.s32.totalorder %s66, %s82
    %p84 = scmp.eq.s32.totalorder %s17, 0
    %p85 = por %p83, %p84
    %s86 = smul.u32 %s18, 2
    %s87 = sadd.s32 %s86, %s19
    %s88 = smul.u32 %s30, 2
    %s89 = sadd.s32 %s88, %s26
    %s90 = ssub.s32 %s87, %s89
    %p91 = scmp.eq.s32.totalorder %s90, 0
    %s93 = sadd.s32 %s92, 1
    %s94 = scalar_select %p91, %s92, %s93
    %p97 = pneg %p91
    %p98 = scmp.eq.s32.totalorder %s11, 3
    %p99 = por %p97, %p98
    %p100 = scmp.ne.s32.totalorder %s92, %s95
    %p101 = scmp.eq.s32.totalorder %s11, 0
    %p102 = por %p100, %p101
    %p103 = scmp.ne.s32.totalorder %s92, %s95
    %p104 = scmp.eq.s32.totalorder %s16, 3
    %p105 = por %p103, %p104
    %p106 = scmp.ne.s32.totalorder %s95, %s96
    %p107 = scmp.eq.s32.totalorder %s16, 0
    %p108 = por %p106, %p107
    %p109 = scmp.ne.s32.totalorder %s95, %s96
    %p110 = scmp.eq.s32.totalorder %s17, 3
    %p111 = por %p109, %p110
    %p113 = scmp.ne.s32.totalorder %s96, %s112
    %p114 = scmp.eq.s32.totalorder %s17, 0
    %p115 = por %p113, %p114
    %s116 = ssub.s32 %s18, %s30
    %p117 = scmp.eq.s32.totalorder %s116, 0
    %s119 = sadd.s32 %s118, 1
    %s120 = scalar_select %p117, %s118, %s119
    %p123 = pneg %p117
    %p124 = scmp.eq.s32.totalorder %s11, 3
    %p125 = por %p123, %p124
    %p126 = scmp.ne.s32.totalorder %s118, %s121
    %p127 = scmp.eq.s32.totalorder %s11, 0
    %p128 = por %p126, %p127
    %p129 = scmp.ne.s32.totalorder %s118, %s121
    %p130 = scmp.eq.s32.totalorder %s16, 3
    %p131 = por %p129, %p130
    %p132 = scmp.ne.s32.totalorder %s121, %s122
    %p133 = scmp.eq.s32.totalorder %s16, 0
    %p134 = por %p132, %p133
    %p135 = scmp.ne.s32.totalorder %s121, %s122
    %p136 = scmp.eq.s32.totalorder %s17, 3
    %p137 = por %p135, %p136
    %p139 = scmp.ne.s32.totalorder %s122, %s138
    %p140 = scmp.eq.s32.totalorder %s17, 0
    %p141 = por %p139, %p140
    %s142 = ssub.s32 %s18, %s30
    %p143 = scmp.eq.s32.totalorder %s142, 0
    %s145 = sadd.s32 %s144, 1
    %s146 = scalar_select %p143, %s144, %s145
    %p149 = pneg %p143
    %p150 = scmp.eq.s32.totalorder %s11, 3
    %p151 = por %p149, %p150
    %p152 = scmp.ne.s32.totalorder %s144, %s147
    %p153 = scmp.eq.s32.totalorder %s11, 0
    %p154 = por %p152, %p153
    %p155 = scmp.ne.s32.totalorder %s144, %s147
    %p156 = scmp.eq.s32.totalorder %s16, 3
    %p157 = por %p155, %p156
    %p158 = scmp.ne.s32.totalorder %s147, %s148
    %p159 = scmp.eq.s32.totalorder %s16, 0
    %p160 = por %p158, %p159
    %p161 = scmp.ne.s32.totalorder %s147, %s148
    %p162 = scmp.eq.s32.totalorder %s17, 3
    %p163 = por %p161, %p162
    %p165 = scmp.ne.s32.totalorder %s148, %s164
    %p166 = scmp.eq.s32.totalorder %s17, 0
    %p167 = por %p165, %p166
    %p168 = scmp.le.s32.totalorder 1, %s11
    %p169 = scmp.lt.s32.totalorder %s11, 5
    %p170 = pnand %p168, %p169
    %p171 = pneg %p170
    // Predicated region
    $region9: #{flatten_se_layer.2} parent=5 // pred_check
      _
    $region10: #{flatten_se_layer.2} parent=5 // pred_check_branch
      %173 = sbr.rel (%p170) target = $region12
    $region11: #{flatten_se_layer.2} parent=5 // pred_region
      %s174 = ssub.s32 %s11, 1
      // Predicated region
      $region13: #{flatten_se_layer.2} parent=11 // pred_check
        %p175 = pneg %p44
      $region14: #{flatten_se_layer.2} parent=11 // pred_check_branch
        %177 = sbr.rel (%p175) target = $region16
      $region15: #{flatten_se_layer.2} parent=11 // pred_region
        _
      $region16: #{flatten_se_layer.2} parent=11 // pred_fallthru
        _
    $region12: #{flatten_se_layer.2} parent=5 // pred_fallthru
      _
    %p178 = scmp.lt.s32.totalorder %s11, 4
    // Predicated region
    $region17: #{flatten_se_layer.2} parent=5 // pred_check
      %p179 = pneg %p178
    $region18: #{flatten_se_layer.2} parent=5 // pred_check_branch
      %181 = sbr.rel (%p179) target = $region20
    $region19: #{flatten_se_layer.2} parent=5 // pred_region
      // Predicated region
      $region21: #{flatten_se_layer.2} parent=19 // pred_check
        %p182 = pneg %p72
      $region22: #{flatten_se_layer.2} parent=19 // pred_check_branch
        %184 = sbr.rel (%p182) target = $region24
      $region23: #{flatten_se_layer.2} parent=19 // pred_region
        %s185 = smul.u32 %s18, 2
        %s186 = sadd.s32 %s185, %s19
        %p187 = scmp.lt.s32.totalorder %s186, 3
        %s188 = scalar_select %p187, %s186, 3
        %s189 = smul.u32 4, %s188
        %p190 = scmp.lt.s32.totalorder %s189, 15
        %s191 = scalar_select %p190, %s189, 15
        %s192 = smul.addr %s191, 8
        %s193 = scalar_lea.vmem %s1, %s192
        %s194 = smul.u32 %s18, 2
        %s195 = sadd.s32 %s194, %s19
        %p196 = scmp.lt.s32.totalorder %s195, 3
        %s197 = scalar_select %p196, %s195, 3
        %s198 = smul.u32 4, %s197
      $region24: #{flatten_se_layer.2} parent=19 // pred_fallthru
        _
      // Predicated region
      $region25: #{flatten_se_layer.2} parent=19 // pred_check
        %p199 = pneg %p102
      $region26: #{flatten_se_layer.2} parent=19 // pred_check_branch
        %201 = sbr.rel (%p199) target = $region28
      $region27: #{flatten_se_layer.2} parent=19 // pred_region
        %s202 = smul.u32 %s18, 2
        %s203 = sadd.s32 %s202, %s19
        %s204 = smul.u32 4, %s203
        %p205 = scmp.lt.s32.totalorder %s204, 15
        %s206 = scalar_select %p205, %s204, 15
        %s207 = smul.addr %s206, 8
        %s208 = scalar_lea.vmem %s2, %s207
        %s209 = smul.u32 %s18, 2
        %s210 = sadd.s32 %s209, %s19
        %s211 = smul.u32 4, %s210
      $region28: #{flatten_se_layer.2} parent=19 // pred_fallthru
        _
    $region20: #{flatten_se_layer.2} parent=5 // pred_fallthru
      _
    %p212 = scmp.le.s32.totalorder 1, %s11
    %p213 = scmp.lt.s32.totalorder %s11, 5
    %p214 = pnand %p212, %p213
    %p215 = pneg %p214
    // Predicated region
    $region29: #{flatten_se_layer.2} parent=5 // pred_check
      _
    $region30: #{flatten_se_layer.2} parent=5 // pred_check_branch
      %217 = sbr.rel (%p214) target = $region32
    $region31: #{flatten_se_layer.2} parent=5 // pred_region
      %s218 = ssub.s32 %s11, 1
      %p219 = pneg %p44
      %p220 = pneg %p41
      %s221 = smul.u32 %s20, 2
      %s222 = sadd.s32 %s221, %s21
      %p223 = scmp.lt.s32.totalorder %s222, 3
      %s224 = scalar_select %p223, %s222, 3
      %s225 = smul.u32 4, %s224
      %p226 = scmp.lt.s32.totalorder %s225, 15
      %s227 = scalar_select %p226, %s225, 15
      %s228 = smul.addr %s227, 8
      %s229 = scalar_lea.vmem %s1, %s228
      %p230 = pneg %p78
      %p231 = pneg %p75
      %s232 = smul.u32 %s20, 2
      %s233 = sadd.s32 %s232, %s21
      %s234 = smul.u32 4, %s233
      %p235 = scmp.lt.s32.totalorder %s234, 15
      %s236 = scalar_select %p235, %s234, 15
      %s237 = smul.addr %s236, 8
      %s238 = scalar_lea.vmem %s2, %s237
      %p239 = pneg %p108
      %p240 = pneg %p105
      %p241 = pneg %p134
      %p242 = pneg %p131
      %p243 = scmp.lt.s32.totalorder %s20, 1
      %s244 = scalar_select %p243, %s20, 1
      %s245 = smul.addr %s244, 4
      %s246 = scalar_lea.vmem %s3, %s245
      %p247 = pneg %p160
      %p248 = pneg %p157
      %p249 = scmp.lt.s32.totalorder %s20, 1
      %s250 = scalar_select %p249, %s20, 1
      %s251 = smul.addr %s250, 4
      %s252 = scalar_lea.vmem %s4, %s251
      %s253 = smul.u32 %s20, 2
      %s254 = sadd.s32 %s253, %s21
      %p255 = scmp.lt.s32.totalorder %s254, 3
      %s256 = scalar_select %p255, %s254, 3
      %s257 = smul.u32 4, %s256
      %p258 = scmp.lt.s32.totalorder %s257, 15
      %s259 = scalar_select %p258, %s257, 15
      %s260 = smul.addr %s259, 8
      %s261 = scalar_lea.vmem %s1, %s260
      %s262 = smul.u32 %s20, 2
      %s263 = sadd.s32 %s262, %s21
      %p264 = scmp.lt.s32.totalorder %s263, 3
      %s265 = scalar_select %p264, %s263, 3
      %s266 = smul.u32 4, %s265
      %s267 = smul.u32 %s20, 2
      %s268 = sadd.s32 %s267, %s21
      %s269 = smul.u32 4, %s268
      %p270 = scmp.lt.s32.totalorder %s269, 15
      %s271 = scalar_select %p270, %s269, 15
      %s272 = smul.addr %s271, 8
      %s273 = scalar_lea.vmem %s2, %s272
      %s274 = smul.u32 %s20, 2
      %s275 = sadd.s32 %s274, %s21
      %s276 = smul.u32 4, %s275
      %p277 = scmp.lt.s32.totalorder %s20, 1
      %s278 = scalar_select %p277, %s20, 1
      %s279 = smul.addr %s278, 4
      %s280 = scalar_lea.vmem %s3, %s279
      %p281 = scmp.lt.s32.totalorder %s20, 1
      %s282 = scalar_select %p281, %s20, 1
      %s283 = smul.addr %s282, 4
      %s284 = scalar_lea.vmem %s4, %s283
      %p286 = scmp.eq.s32.totalorder %s21, 0
      // Predicated region
      $region33: #{flatten_se_layer.2} parent=31 // pred_check
        %p287 = pneg %p286
      $region34: #{flatten_se_layer.2} parent=31 // pred_check_branch
        %289 = sbr.rel (%p287) target = $region36
      $region35: #{flatten_se_layer.2} parent=31 // pred_region
        %290 = vst [vmem:[%s280] sm:$0xf] 0.0
        %vm291 = vcmask 60416
        %292 = vst.msk [vmem:[%s284] sm:$0xf] %vm291, 0.0
      $region36: #{flatten_se_layer.2} parent=31 // pred_fallthru
        _
      %v293 = vld [vmem:[%s261] sm:$0xff]
      %v294 = vld [vmem:[%s261 + $0x8] sm:$0xff]
      %v295 = vld [vmem:[%s261 + $0x10] sm:$0xff]
      %v296 = vld [vmem:[%s261 + $0x18] sm:$0xff]
      %v297 = vld [vmem:[%s273] sm:$0xff]
      %v298 = vld [vmem:[%s273 + $0x8] sm:$0xff]
      %v299 = vld [vmem:[%s273 + $0x10] sm:$0xff]
      %v300 = vld [vmem:[%s273 + $0x18] sm:$0xff]
      %v301 = vcvt.s32.f32 %v297
      %v302 = vcvt.s32.f32 %v298
      %v303 = vcvt.s32.f32 %v299
      %v304 = vcvt.s32.f32 %v300
      %v305 = vpack.c.bf16 %v302, %v301
      %v306 = vpack.c.bf16 %v304, %v303
      %v307 = vld [vmem:[%s0] sm:$0xf]
      %vm308 = vcmask 64512
      %v310 = vsel %vm308, %v305, 0
      %v313 = vsel %vm308, %v306, 0
      %vm315 = vcmask 1043456
      %v317 = vsel %vm315, %v307, 0
      %319 = vmatprep.subr.bf16.mxu0 0
      %320 = vmatpush1.bf16.msra.mxu0 %v317
      %321 = vmatprep.subr.bf16.mxu0 0
      %322 = vmatpush1.bf16.msra.mxu0 0
      %323 = vmatprep.subr.bf16.mxu0 0
      %324 = vmatpush1.bf16.msra.mxu0 0
      %325 = vmatprep.subr.bf16.mxu0 0
      %326 = vmatpush1.bf16.msra.mxu0 0
      %327 = vmatprep.subr.bf16.mxu0 0
      %328 = vmatpush1.bf16.msra.mxu0 0
      %329 = vmatprep.subr.bf16.mxu0 0
      %330 = vmatpush1.bf16.msra.mxu0 0
      %331 = vmatprep.subr.bf16.mxu0 0
      %332 = vmatpush1.bf16.msra.mxu0 0
      %333 = vmatprep.subr.bf16.mxu0 0
      %334 = vmatpush1.bf16.msra.mxu0 0
      %335 = vmatprep.subr.bf16.mxu0 0
      %336 = vmatpush1.bf16.msra.mxu0 0
      %337 = vmatprep.subr.bf16.mxu0 0
      %338 = vmatpush1.bf16.msra.mxu0 0
      %339 = vmatprep.subr.bf16.mxu0 0
      %340 = vmatpush1.bf16.msra.mxu0 0
      %341 = vmatprep.subr.bf16.mxu0 0
      %342 = vmatpush1.bf16.msra.mxu0 0
      %343 = vmatprep.subr.bf16.mxu0 0
      %344 = vmatpush1.bf16.msra.mxu0 0
      %345 = vmatprep.subr.bf16.mxu0 0
      %346 = vmatpush1.bf16.msra.mxu0 0
      %347 = vmatprep.subr.bf16.mxu0 0
      %348 = vmatpush1.bf16.msra.mxu0 0
      %349 = vmatprep.subr.bf16.mxu0 0
      %350 = vmatpush1.bf16.msra.mxu0 0
      %351 = vmatprep.mubr.bf16.mxu0 0
      %352 = vmatmul.mubr.bf16.gmra.mrb[0].mxu0 %v310
      %v353 = vpop.f32.mrb[0].mxu0
      %v354 = vadd.f32 0.0, %v353
      %v355 = vpop.f32.mrb[0].mxu0
      %v356 = vpop.f32.mrb[0].mxu0
      %v357 = vadd.f32 0.0, %v356
      %v358 = vpop.f32.mrb[0].mxu0
      %359 = vmatprep.mubr.bf16.mxu0 0
      %360 = vmatmul.mubr.bf16.gmra.mrb[0].mxu0 %v313
      %v361 = vpop.f32.mrb[0].mxu0
      %v362 = vadd.f32 0.0, %v361
      %v363 = vpop.f32.mrb[0].mxu0
      %v364 = vpop.f32.mrb[0].mxu0
      %v365 = vadd.f32 0.0, %v364
      %v366 = vpop.f32.mrb[0].mxu0
      %367 = vdwg.mxu0
      %vm368 = vcmp.eq.f32.partialorder %v354, 0.0
      %vm369 = vcmp.eq.f32.partialorder %v357, 0.0
      %vm370 = vcmp.eq.f32.partialorder %v362, 0.0
      %vm371 = vcmp.eq.f32.partialorder %v365, 0.0
      %v372 = vsel %vm368, %v293, 0.0
      %v373 = vsel %vm369, %v294, 0.0
      %v374 = vsel %vm370, %v295, 0.0
      %v375 = vsel %vm371, %v296, 0.0
      %v376 = vadd.f32 %v372, %v373
      %v377 = vadd.f32 %v376, %v374
      %v378 = vadd.f32 %v377, %v375
      %v379 = vrot.slane %v378, 4
      %v380 = vadd.f32 %v378, %v379
      %v381 = vrot.slane %v380, 2
      %v382 = vadd.f32 %v380, %v381
      %v383 = vrot.slane %v382, 1
      %v384 = vadd.f32 %v382, %v383
      %v385 = vld [vmem:[%s280] sm:$0x1]
      %v386 = vadd.f32 %v385, %v384
      %387 = vst [vmem:[%s280] sm:$0x1] %v386
      %vm388 = vcmp.eq.s32.totalorder %v297, 0
      %vm389 = vcmp.eq.s32.totalorder %v298, 0
      %vm390 = vcmp.eq.s32.totalorder %v299, 0
      %vm391 = vcmp.eq.s32.totalorder %v300, 0
      %v392 = vsel %vm388, 1, 0
      %v393 = vsel %vm389, 1, 0
      %v394 = vsel %vm390, 1, 0
      %v395 = vsel %vm391, 1, 0
      %v396 = vcvt.s32.f32 %v392
      %v397 = vcvt.s32.f32 %v393
      %v398 = vcvt.s32.f32 %v394
      %v399 = vcvt.s32.f32 %v395
      %v400 = vsel %vm308, %v396, 0.0
      %v401 = vsel %vm308, %v397, 0.0
      %v402 = vadd.f32 %v400, %v401
      %v403 = vsel %vm308, %v398, 0.0
      %v404 = vadd.f32 %v402, %v403
      %v405 = vsel %vm308, %v399, 0.0
      %v406 = vadd.f32 %v404, %v405
      %v407 = vrot.slane %v406, 4
      %v408 = vadd.f32 %v406, %v407
      %v409 = vrot.slane %v408, 2
      %v410 = vadd.f32 %v408, %v409
      %v411 = vrot.slane %v410, 1
      %v412 = vadd.f32 %v410, %v411
      %v413 = vld [vmem:[%s284] sm:$0x1]
      %v414 = vadd.f32 %v413, %v412
      %vm415 = vcmask 57344
      %416 = vst.msk [vmem:[%s284] sm:$0x1] %vm415, %v414
      %vm417 = vcmp.eq.f32.partialorder %v354, 1.0
      %vm418 = vcmp.eq.f32.partialorder %v357, 1.0
      %vm419 = vcmp.eq.f32.partialorder %v362, 1.0
      %vm420 = vcmp.eq.f32.partialorder %v365, 1.0
      %v421 = vsel %vm417, %v293, 0.0
      %v422 = vsel %vm418, %v294, 0.0
      %v423 = vsel %vm419, %v295, 0.0
      %v424 = vsel %vm420, %v296, 0.0
      %v425 = vadd.f32 %v421, %v422
      %v426 = vadd.f32 %v425, %v423
      %v427 = vadd.f32 %v426, %v424
      %v428 = vrot.slane %v427, 4
      %v429 = vadd.f32 %v427, %v428
      %v430 = vrot.slane %v429, 2
      %v431 = vadd.f32 %v429, %v430
      %v432 = vrot.slane %v431, 1
      %v433 = vadd.f32 %v431, %v432
      %v434 = vld [vmem:[%s280 + $0x1] sm:$0x1]
      %v435 = vadd.f32 %v434, %v433
      %436 = vst [vmem:[%s280 + $0x1] sm:$0x1] %v435
      %vm437 = vcmp.eq.s32.totalorder %v297, 1
      %vm438 = vcmp.eq.s32.totalorder %v298, 1
      %vm439 = vcmp.eq.s32.totalorder %v299, 1
      %vm440 = vcmp.eq.s32.totalorder %v300, 1
      %v441 = vsel %vm437, 1, 0
      %v442 = vsel %vm438, 1, 0
      %v443 = vsel %vm439, 1, 0
      %v444 = vsel %vm440, 1, 0
      %v445 = vcvt.s32.f32 %v441
      %v446 = vcvt.s32.f32 %v442
      %v447 = vcvt.s32.f32 %v443
      %v448 = vcvt.s32.f32 %v444
      %v449 = vsel %vm308, %v445, 0.0
      %v450 = vsel %vm308, %v446, 0.0
      %v451 = vadd.f32 %v449, %v450
      %v452 = vsel %vm308, %v447, 0.0
      %v453 = vadd.f32 %v451, %v452
      %v454 = vsel %vm308, %v448, 0.0
      %v455 = vadd.f32 %v453, %v454
      %v456 = vrot.slane %v455, 4
      %v457 = vadd.f32 %v455, %v456
      %v458 = vrot.slane %v457, 2
      %v459 = vadd.f32 %v457, %v458
      %v460 = vrot.slane %v459, 1
      %v461 = vadd.f32 %v459, %v460
      %v462 = vld [vmem:[%s284 + $0x1] sm:$0x1]
      %v463 = vadd.f32 %v462, %v461
      %464 = vst.msk [vmem:[%s284 + $0x1] sm:$0x1] %vm415, %v463
      %vm465 = vcmp.eq.f32.partialorder %v354, 2.0
      %vm466 = vcmp.eq.f32.partialorder %v357, 2.0
      %vm467 = vcmp.eq.f32.partialorder %v362, 2.0
      %vm468 = vcmp.eq.f32.partialorder %v365, 2.0
      %v469 = vsel %vm465, %v293, 0.0
      %v470 = vsel %vm466, %v294, 0.0
      %v471 = vsel %vm467, %v295, 0.0
      %v472 = vsel %vm468, %v296, 0.0
      %v473 = vadd.f32 %v469, %v470
      %v474 = vadd.f32 %v473, %v471
      %v475 = vadd.f32 %v474, %v472
      %v476 = vrot.slane %v475, 4
      %v477 = vadd.f32 %v475, %v476
      %v478 = vrot.slane %v477, 2
      %v479 = vadd.f32 %v477, %v478
      %v480 = vrot.slane %v479, 1
      %v481 = vadd.f32 %v479, %v480
      %v482 = vld [vmem:[%s280 + $0x2] sm:$0x1]
      %v483 = vadd.f32 %v482, %v481
      %484 = vst [vmem:[%s280 + $0x2] sm:$0x1] %v483
      %vm485 = vcmp.eq.s32.totalorder %v297, 2
      %vm486 = vcmp.eq.s32.totalorder %v298, 2
      %vm487 = vcmp.eq.s32.totalorder %v299, 2
      %vm488 = vcmp.eq.s32.totalorder %v300, 2
      %v489 = vsel %vm485, 1, 0
      %v490 = vsel %vm486, 1, 0
      %v491 = vsel %vm487, 1, 0
      %v492 = vsel %vm488, 1, 0
      %v493 = vcvt.s32.f32 %v489
      %v494 = vcvt.s32.f32 %v490
      %v495 = vcvt.s32.f32 %v491
      %v496 = vcvt.s32.f32 %v492
      %v497 = vsel %vm308, %v493, 0.0
      %v498 = vsel %vm308, %v494, 0.0
      %v499 = vadd.f32 %v497, %v498
      %v500 = vsel %vm308, %v495, 0.0
      %v501 = vadd.f32 %v499, %v500
      %v502 = vsel %vm308, %v496, 0.0
      %v503 = vadd.f32 %v501, %v502
      %v504 = vrot.slane %v503, 4
      %v505 = vadd.f32 %v503, %v504
      %v506 = vrot.slane %v505, 2
      %v507 = vadd.f32 %v505, %v506
      %v508 = vrot.slane %v507, 1
      %v509 = vadd.f32 %v507, %v508
      %v510 = vld [vmem:[%s284 + $0x2] sm:$0x1]
      %v511 = vadd.f32 %v510, %v509
      %512 = vst.msk [vmem:[%s284 + $0x2] sm:$0x1] %vm415, %v511
      %vm513 = vcmp.eq.f32.partialorder %v354, 3.0
      %vm514 = vcmp.eq.f32.partialorder %v357, 3.0
      %vm515 = vcmp.eq.f32.partialorder %v362, 3.0
      %vm516 = vcmp.eq.f32.partialorder %v365, 3.0
      %v517 = vsel %vm513, %v293, 0.0
      %v518 = vsel %vm514, %v294, 0.0
      %v519 = vsel %vm515, %v295, 0.0
      %v520 = vsel %vm516, %v296, 0.0
      %v521 = vadd.f32 %v517, %v518
      %v522 = vadd.f32 %v521, %v519
      %v523 = vadd.f32 %v522, %v520
      %v524 = vrot.slane %v523, 4
      %v525 = vadd.f32 %v523, %v524
      %v526 = vrot.slane %v525, 2
      %v527 = vadd.f32 %v525, %v526
      %v528 = vrot.slane %v527, 1
      %v529 = vadd.f32 %v527, %v528
      %v530 = vld [vmem:[%s280 + $0x3] sm:$0x1]
      %v531 = vadd.f32 %v530, %v529
      %532 = vst [vmem:[%s280 + $0x3] sm:$0x1] %v531
      %vm533 = vcmp.eq.s32.totalorder %v297, 3
      %vm534 = vcmp.eq.s32.totalorder %v298, 3
      %vm535 = vcmp.eq.s32.totalorder %v299, 3
      %vm536 = vcmp.eq.s32.totalorder %v300, 3
      %v537 = vsel %vm533, 1, 0
      %v538 = vsel %vm534, 1, 0
      %v539 = vsel %vm535, 1, 0
      %v540 = vsel %vm536, 1, 0
      %v541 = vcvt.s32.f32 %v537
      %v542 = vcvt.s32.f32 %v538
      %v543 = vcvt.s32.f32 %v539
      %v544 = vcvt.s32.f32 %v540
      %v545 = vsel %vm308, %v541, 0.0
      %v546 = vsel %vm308, %v542, 0.0
      %v547 = vadd.f32 %v545, %v546
      %v548 = vsel %vm308, %v543, 0.0
      %v549 = vadd.f32 %v547, %v548
      %v550 = vsel %vm308, %v544, 0.0
      %v551 = vadd.f32 %v549, %v550
      %v552 = vrot.slane %v551, 4
      %v553 = vadd.f32 %v551, %v552
      %v554 = vrot.slane %v553, 2
      %v555 = vadd.f32 %v553, %v554
      %v556 = vrot.slane %v555, 1
      %v557 = vadd.f32 %v555, %v556
      %v558 = vld [vmem:[%s284 + $0x3] sm:$0x1]
      %v559 = vadd.f32 %v558, %v557
      %560 = vst.msk [vmem:[%s284 + $0x3] sm:$0x1] %vm415, %v559
      %p561 = scmp.lt.s32.totalorder %s20, 1
      %s562 = scalar_select %p561, %s20, 1
      %s563 = smul.addr %s562, 4
      %s564 = scalar_lea.vmem %s3, %s563
      %p565 = scmp.lt.s32.totalorder %s20, 1
      %s566 = scalar_select %p565, %s20, 1
      %s567 = smul.addr %s566, 4
      %s568 = scalar_lea.vmem %s4, %s567
      // Predicated region
      $region37: #{flatten_se_layer.2} parent=31 // pred_check
        %p569 = pneg %p131
      $region38: #{flatten_se_layer.2} parent=31 // pred_check_branch
        %571 = sbr.rel (%p569) target = $region40
      $region39: #{flatten_se_layer.2} parent=31 // pred_region
        _
      $region40: #{flatten_se_layer.2} parent=31 // pred_fallthru
        _
      // Predicated region
      $region41: #{flatten_se_layer.2} parent=31 // pred_check
        %p572 = pneg %p157
      $region42: #{flatten_se_layer.2} parent=31 // pred_check_branch
        %574 = sbr.rel (%p572) target = $region44
      $region43: #{flatten_se_layer.2} parent=31 // pred_region
        _
      $region44: #{flatten_se_layer.2} parent=31 // pred_fallthru
        _
    $region32: #{flatten_se_layer.2} parent=5 // pred_fallthru
      _
    %p575 = scmp.le.s32.totalorder 2, %s11
    // Predicated region
    $region45: #{flatten_se_layer.2} parent=5 // pred_check
      %p576 = pneg %p575
    $region46: #{flatten_se_layer.2} parent=5 // pred_check_branch
      %578 = sbr.rel (%p576) target = $region48
    $region47: #{flatten_se_layer.2} parent=5 // pred_region
      %s579 = ssub.s32 %s11, 2
      // Predicated region
      $region49: #{flatten_se_layer.2} parent=47 // pred_check
        %p580 = pneg %p137
      $region50: #{flatten_se_layer.2} parent=47 // pred_check_branch
        %582 = sbr.rel (%p580) target = $region52
      $region51: #{flatten_se_layer.2} parent=47 // pred_region
        %p583 = scmp.lt.s32.totalorder %s22, 1
        %s584 = scalar_select %p583, %s22, 1
        %s585 = smul.addr %s584, 4
        %s586 = scalar_lea.vmem %s3, %s585
      $region52: #{flatten_se_layer.2} parent=47 // pred_fallthru
        _
      // Predicated region
      $region53: #{flatten_se_layer.2} parent=47 // pred_check
        %p587 = pneg %p163
      $region54: #{flatten_se_layer.2} parent=47 // pred_check_branch
        %589 = sbr.rel (%p587) target = $region56
      $region55: #{flatten_se_layer.2} parent=47 // pred_region
        %p590 = scmp.lt.s32.totalorder %s22, 1
        %s591 = scalar_select %p590, %s22, 1
        %s592 = smul.addr %s591, 4
        %s593 = scalar_lea.vmem %s4, %s592
      $region56: #{flatten_se_layer.2} parent=47 // pred_fallthru
        _
    $region48: #{flatten_se_layer.2} parent=5 // pred_fallthru
      _
  $region6: #{flatten_se_layer.2} parent=0 // loop_footer
    %s15 = sadd.s32 1, %s11
  $region7: #{flatten_se_layer.2} parent=0 // loop_footer_branch
    %10 = sbr.rel target = $region3
  $region8: #{flatten_se_layer.2} parent=0 // loop_exit
    _

// kernel: flatten_se_layer.3
$region0: #{flatten_se_layer.3}
  #allocation0 [shape = 'u32[]', space=smem, size = 0x4, offset = 0x4, fixed_abs, tag = 'smem constant byte address 0x4 - core index']
  #allocation1 [shape = 'u32[144,128]{1,0:T(1,128)}', space=vmem, size = 0x12000, scoped, tag = 'internal scratch']
  %s0 = inlined_call_operand.vmem [shape: bf16[8,32], index: 0, kind: input, shape index: {}]
  %s1 = inlined_call_operand.vmem [shape: f32[1,32], index: 1, kind: input, shape index: {}]
  %s2 = inlined_call_operand.vmem [shape: bf16[32,128], index: 2, kind: input, shape index: {}]
  %s3 = inlined_call_operand.vmem [shape: bf16[32,128], index: 3, kind: input, shape index: {}]
  %s4 = inlined_call_operand.vmem [shape: f32[128,128], index: 4, kind: input, shape index: {}]
  %s5 = inlined_call_operand.vmem [shape: s32[128,8], index: 5, kind: input, shape index: {}]
  %s6 = inlined_call_operand.vmem [shape: f32[128,128], index: 6, kind: output, shape index: {}]
  %s7 = sld [smem:[#allocation0]]
  $region57: #{flatten_se_layer.3} parent=0
    _
  %s9 = ssub.s32 1, %s7
  %s10 = scalar_select 0, %s9, %s7
  loop: start=0, step=1, limit=6
  $region2: #{flatten_se_layer.3} parent=0 // loop_pre_header
    _
  $region3: #{flatten_se_layer.3} parent=0 // loop_header
    %s12 = sphi 0, %s16
    %p13 = scmp.ge.s32.totalorder %s12, 6
    %s20 = sphi 0, %s20
    %s22 = sphi 0, %s20
    %s23 = sphi 0, %s22
    %s37 = sphi 0, %s23
    %s41 = sphi 0, %s41
    %s43 = sphi 0, %s41
    %s44 = sphi 0, %s43
    %s58 = sphi 0, %s44
    %s62 = sphi 0, %s62
    %s64 = sphi 0, %s62
    %s65 = sphi 0, %s64
    %s79 = sphi 0, %s65
    %s83 = sphi 0, %s83
    %s85 = sphi 0, %s83
    %s86 = sphi 0, %s85
    %s100 = sphi 0, %s86
    %s106 = sphi 0, %s108
    %s109 = sphi 0, %s106
    %s110 = sphi 0, %s109
    %s126 = sphi 0, %s110
    %s132 = sphi 0, %s134
    %s135 = sphi 0, %s132
    %s136 = sphi 0, %s135
    %s152 = sphi 0, %s136
    %s158 = sphi 0, %s160
    %s161 = sphi 0, %s158
    %s162 = sphi 0, %s161
    %s178 = sphi 0, %s162
  $region4: #{flatten_se_layer.3} parent=0 // loop_header_branch
    %15 = sbr.rel (%p13) target = $region8
  $region5: #{flatten_se_layer.3} parent=0 // loop_body
    %s17 = ssub.s32 %s12, 1
    %s18 = ssub.s32 %s12, 2
    %s19 = sadd.s32 %s12, 1
    %s21 = sadd.s32 %s20, 1
    %p24 = scmp.eq.s32.totalorder %s12, 3
    %p25 = scmp.ne.s32.totalorder %s20, %s22
    %p26 = scmp.eq.s32.totalorder %s12, 0
    %p27 = por %p25, %p26
    %p28 = scmp.ne.s32.totalorder %s20, %s22
    %p29 = scmp.eq.s32.totalorder %s17, 3
    %p30 = por %p28, %p29
    %p31 = scmp.ne.s32.totalorder %s22, %s23
    %p32 = scmp.eq.s32.totalorder %s17, 0
    %p33 = por %p31, %p32
    %p34 = scmp.ne.s32.totalorder %s22, %s23
    %p35 = scmp.eq.s32.totalorder %s18, 3
    %p36 = por %p34, %p35
    %p38 = scmp.ne.s32.totalorder %s23, %s37
    %p39 = scmp.eq.s32.totalorder %s18, 0
    %p40 = por %p38, %p39
    %s42 = sadd.s32 %s41, 1
    %p45 = scmp.eq.s32.totalorder %s12, 3
    %p46 = scmp.ne.s32.totalorder %s41, %s43
    %p47 = scmp.eq.s32.totalorder %s12, 0
    %p48 = por %p46, %p47
    %p49 = scmp.ne.s32.totalorder %s41, %s43
    %p50 = scmp.eq.s32.totalorder %s17, 3
    %p51 = por %p49, %p50
    %p52 = scmp.ne.s32.totalorder %s43, %s44
    %p53 = scmp.eq.s32.totalorder %s17, 0
    %p54 = por %p52, %p53
    %p55 = scmp.ne.s32.totalorder %s43, %s44
    %p56 = scmp.eq.s32.totalorder %s18, 3
    %p57 = por %p55, %p56
    %p59 = scmp.ne.s32.totalorder %s44, %s58
    %p60 = scmp.eq.s32.totalorder %s18, 0
    %p61 = por %p59, %p60
    %s63 = sadd.s32 %s62, 1
    %p66 = scmp.eq.s32.totalorder %s12, 3
    %p67 = scmp.ne.s32.totalorder %s62, %s64
    %p68 = scmp.eq.s32.totalorder %s12, 0
    %p69 = por %p67, %p68
    %p70 = scmp.ne.s32.totalorder %s62, %s64
    %p71 = scmp.eq.s32.totalorder %s17, 3
    %p72 = por %p70, %p71
    %p73 = scmp.ne.s32.totalorder %s64, %s65
    %p74 = scmp.eq.s32.totalorder %s17, 0
    %p75 = por %p73, %p74
    %p76 = scmp.ne.s32.totalorder %s64, %s65
    %p77 = scmp.eq.s32.totalorder %s18, 3
    %p78 = por %p76, %p77
    %p80 = scmp.ne.s32.totalorder %s65, %s79
    %p81 = scmp.eq.s32.totalorder %s18, 0
    %p82 = por %p80, %p81
    %s84 = sadd.s32 %s83, 1
    %p87 = scmp.eq.s32.totalorder %s12, 3
    %p88 = scmp.ne.s32.totalorder %s83, %s85
    %p89 = scmp.eq.s32.totalorder %s12, 0
    %p90 = por %p88, %p89
    %p91 = scmp.ne.s32.totalorder %s83, %s85
    %p92 = scmp.eq.s32.totalorder %s17, 3
    %p93 = por %p91, %p92
    %p94 = scmp.ne.s32.totalorder %s85, %s86
    %p95 = scmp.eq.s32.totalorder %s17, 0
    %p96 = por %p94, %p95
    %p97 = scmp.ne.s32.totalorder %s85, %s86
    %p98 = scmp.eq.s32.totalorder %s18, 3
    %p99 = por %p97, %p98
    %p101 = scmp.ne.s32.totalorder %s86, %s100
    %p102 = scmp.eq.s32.totalorder %s18, 0
    %p103 = por %p101, %p102
    %s104 = ssub.s32 %s12, %s19
    %p105 = scmp.eq.s32.totalorder %s104, 0
    %s107 = sadd.s32 %s106, 1
    %s108 = scalar_select %p105, %s106, %s107
    %p111 = pneg %p105
    %p112 = scmp.eq.s32.totalorder %s12, 3
    %p113 = por %p111, %p112
    %p114 = scmp.ne.s32.totalorder %s106, %s109
    %p115 = scmp.eq.s32.totalorder %s12, 0
    %p116 = por %p114, %p115
    %p117 = scmp.ne.s32.totalorder %s106, %s109
    %p118 = scmp.eq.s32.totalorder %s17, 3
    %p119 = por %p117, %p118
    %p120 = scmp.ne.s32.totalorder %s109, %s110
    %p121 = scmp.eq.s32.totalorder %s17, 0
    %p122 = por %p120, %p121
    %p123 = scmp.ne.s32.totalorder %s109, %s110
    %p124 = scmp.eq.s32.totalorder %s18, 3
    %p125 = por %p123, %p124
    %p127 = scmp.ne.s32.totalorder %s110, %s126
    %p128 = scmp.eq.s32.totalorder %s18, 0
    %p129 = por %p127, %p128
    %s130 = ssub.s32 %s12, %s19
    %p131 = scmp.eq.s32.totalorder %s130, 0
    %s133 = sadd.s32 %s132, 1
    %s134 = scalar_select %p131, %s132, %s133
    %p137 = pneg %p131
    %p138 = scmp.eq.s32.totalorder %s12, 3
    %p139 = por %p137, %p138
    %p140 = scmp.ne.s32.totalorder %s132, %s135
    %p141 = scmp.eq.s32.totalorder %s12, 0
    %p142 = por %p140, %p141
    %p143 = scmp.ne.s32.totalorder %s132, %s135
    %p144 = scmp.eq.s32.totalorder %s17, 3
    %p145 = por %p143, %p144
    %p146 = scmp.ne.s32.totalorder %s135, %s136
    %p147 = scmp.eq.s32.totalorder %s17, 0
    %p148 = por %p146, %p147
    %p149 = scmp.ne.s32.totalorder %s135, %s136
    %p150 = scmp.eq.s32.totalorder %s18, 3
    %p151 = por %p149, %p150
    %p153 = scmp.ne.s32.totalorder %s136, %s152
    %p154 = scmp.eq.s32.totalorder %s18, 0
    %p155 = por %p153, %p154
    %s156 = ssub.s32 %s12, %s19
    %p157 = scmp.eq.s32.totalorder %s156, 0
    %s159 = sadd.s32 %s158, 1
    %s160 = scalar_select %p157, %s158, %s159
    %p163 = pneg %p157
    %p164 = scmp.eq.s32.totalorder %s12, 3
    %p165 = por %p163, %p164
    %p166 = scmp.ne.s32.totalorder %s158, %s161
    %p167 = scmp.eq.s32.totalorder %s12, 0
    %p168 = por %p166, %p167
    %p169 = scmp.ne.s32.totalorder %s158, %s161
    %p170 = scmp.eq.s32.totalorder %s17, 3
    %p171 = por %p169, %p170
    %p172 = scmp.ne.s32.totalorder %s161, %s162
    %p173 = scmp.eq.s32.totalorder %s17, 0
    %p174 = por %p172, %p173
    %p175 = scmp.ne.s32.totalorder %s161, %s162
    %p176 = scmp.eq.s32.totalorder %s18, 3
    %p177 = por %p175, %p176
    %p179 = scmp.ne.s32.totalorder %s162, %s178
    %p180 = scmp.eq.s32.totalorder %s18, 0
    %p181 = por %p179, %p180
    %p182 = scmp.le.s32.totalorder 1, %s12
    %p183 = scmp.lt.s32.totalorder %s12, 5
    %p184 = pnand %p182, %p183
    %p185 = pneg %p184
    // Predicated region
    $region9: #{flatten_se_layer.3} parent=5 // pred_check
      _
    $region10: #{flatten_se_layer.3} parent=5 // pred_check_branch
      %187 = sbr.rel (%p184) target = $region12
    $region11: #{flatten_se_layer.3} parent=5 // pred_region
      %s188 = ssub.s32 %s12, 1
      // Predicated region
      $region13: #{flatten_se_layer.3} parent=11 // pred_check
        %p189 = pneg %p33
      $region14: #{flatten_se_layer.3} parent=11 // pred_check_branch
        %191 = sbr.rel (%p189) target = $region16
      $region15: #{flatten_se_layer.3} parent=11 // pred_region
        _
      $region16: #{flatten_se_layer.3} parent=11 // pred_fallthru
        _
      // Predicated region
      $region17: #{flatten_se_layer.3} parent=11 // pred_check
        %p192 = pneg %p54
      $region18: #{flatten_se_layer.3} parent=11 // pred_check_branch
        %194 = sbr.rel (%p192) target = $region20
      $region19: #{flatten_se_layer.3} parent=11 // pred_region
        _
      $region20: #{flatten_se_layer.3} parent=11 // pred_fallthru
        _
      // Predicated region
      $region21: #{flatten_se_layer.3} parent=11 // pred_check
        %p195 = pneg %p75
      $region22: #{flatten_se_layer.3} parent=11 // pred_check_branch
        %197 = sbr.rel (%p195) target = $region24
      $region23: #{flatten_se_layer.3} parent=11 // pred_region
        _
      $region24: #{flatten_se_layer.3} parent=11 // pred_fallthru
        _
      // Predicated region
      $region25: #{flatten_se_layer.3} parent=11 // pred_check
        %p198 = pneg %p96
      $region26: #{flatten_se_layer.3} parent=11 // pred_check_branch
        %200 = sbr.rel (%p198) target = $region28
      $region27: #{flatten_se_layer.3} parent=11 // pred_region
        _
      $region28: #{flatten_se_layer.3} parent=11 // pred_fallthru
        _
    $region12: #{flatten_se_layer.3} parent=5 // pred_fallthru
      _
    %p201 = scmp.lt.s32.totalorder %s12, 4
    // Predicated region
    $region29: #{flatten_se_layer.3} parent=5 // pred_check
      %p202 = pneg %p201
    $region30: #{flatten_se_layer.3} parent=5 // pred_check_branch
      %204 = sbr.rel (%p202) target = $region32
    $region31: #{flatten_se_layer.3} parent=5 // pred_region
      // Predicated region
      $region33: #{flatten_se_layer.3} parent=31 // pred_check
        %p205 = pneg %p116
      $region34: #{flatten_se_layer.3} parent=31 // pred_check_branch
        %207 = sbr.rel (%p205) target = $region36
      $region35: #{flatten_se_layer.3} parent=31 // pred_region
        %s208 = smul.u32 4, %s12
        %p209 = scmp.lt.s32.totalorder %s208, 15
        %s210 = scalar_select %p209, %s208, 15
        %s211 = smul.addr %s210, 8
        %s212 = scalar_lea.vmem %s4, %s211
        %s213 = smul.u32 4, %s12
      $region36: #{flatten_se_layer.3} parent=31 // pred_fallthru
        _
      // Predicated region
      $region37: #{flatten_se_layer.3} parent=31 // pred_check
        %p214 = pneg %p142
      $region38: #{flatten_se_layer.3} parent=31 // pred_check_branch
        %216 = sbr.rel (%p214) target = $region40
      $region39: #{flatten_se_layer.3} parent=31 // pred_region
        %s217 = smul.u32 4, %s12
        %p218 = scmp.lt.s32.totalorder %s217, 15
        %s219 = scalar_select %p218, %s217, 15
        %s220 = smul.addr %s219, 8
        %s221 = scalar_lea.vmem %s5, %s220
        %s222 = smul.u32 4, %s12
      $region40: #{flatten_se_layer.3} parent=31 // pred_fallthru
        _
    $region32: #{flatten_se_layer.3} parent=5 // pred_fallthru
      _
    %p223 = scmp.le.s32.totalorder 1, %s12
    %p224 = scmp.lt.s32.totalorder %s12, 5
    %p225 = pnand %p223, %p224
    %p226 = pneg %p225
    // Predicated region
    $region41: #{flatten_se_layer.3} parent=5 // pred_check
      _
    $region42: #{flatten_se_layer.3} parent=5 // pred_check_branch
      %228 = sbr.rel (%p225) target = $region44
    $region43: #{flatten_se_layer.3} parent=5 // pred_region
      %s229 = ssub.s32 %s12, 1
      %p230 = pneg %p33
      %p231 = pneg %p30
      %p232 = pneg %p54
      %p233 = pneg %p51
      %p234 = pneg %p75
      %p235 = pneg %p72
      %p236 = pneg %p96
      %p237 = pneg %p93
      %s238 = smul.u32 4, %s17
      %p239 = scmp.lt.s32.totalorder %s238, 15
      %s240 = scalar_select %p239, %s238, 15
      %s241 = smul.addr %s240, 8
      %s242 = scalar_lea.vmem %s4, %s241
      %p243 = pneg %p122
      %p244 = pneg %p119
      %s245 = smul.u32 4, %s17
      %p246 = scmp.lt.s32.totalorder %s245, 15
      %s247 = scalar_select %p246, %s245, 15
      %s248 = smul.addr %s247, 8
      %s249 = scalar_lea.vmem %s5, %s248
      %p250 = pneg %p148
      %p251 = pneg %p145
      %p252 = pneg %p174
      %p253 = pneg %p171
      %s254 = smul.u32 4, %s17
      %p255 = scmp.lt.s32.totalorder %s254, 15
      %s256 = scalar_select %p255, %s254, 15
      %s257 = smul.addr %s256, 8
      %s258 = scalar_lea.vmem %s6, %s257
      %s259 = smul.u32 4, %s17
      %p260 = scmp.lt.s32.totalorder %s259, 15
      %s261 = scalar_select %p260, %s259, 15
      %s262 = smul.addr %s261, 8
      %s263 = scalar_lea.vmem %s4, %s262
      %s264 = smul.u32 4, %s17
      %s265 = smul.u32 4, %s17
      %p266 = scmp.lt.s32.totalorder %s265, 15
      %s267 = scalar_select %p266, %s265, 15
      %s268 = smul.addr %s267, 8
      %s269 = scalar_lea.vmem %s5, %s268
      %s270 = smul.u32 4, %s17
      %s271 = smul.u32 4, %s17
      %p272 = scmp.lt.s32.totalorder %s271, 15
      %s273 = scalar_select %p272, %s271, 15
      %s274 = smul.addr %s273, 8
      %s275 = scalar_lea.vmem %s6, %s274
      %s276 = smul.u32 4, %s17
      %v278 = vld [vmem:[%s269] sm:$0xff]
      %v279 = vld [vmem:[%s269 + $0x8] sm:$0xff]
      %v280 = vld [vmem:[%s269 + $0x10] sm:$0xff]
      %v281 = vld [vmem:[%s269 + $0x18] sm:$0xff]
      %v282 = vcvt.s32.f32 %v278
      %v283 = vcvt.s32.f32 %v279
      %v284 = vcvt.s32.f32 %v280
      %v285 = vcvt.s32.f32 %v281
      %v286 = vpack.c.bf16 %v283, %v282
      %v287 = vpack.c.bf16 %v285, %v284
      %v288 = vld [vmem:[%s0] sm:$0xf]
      %vm289 = vcmask 64512
      %v291 = vsel %vm289, %v286, 0
      %v294 = vsel %vm289, %v287, 0
      %vm296 = vcmask 1043456
      %v298 = vsel %vm296, %v288, 0
      %300 = vmatprep.subr.bf16.mxu0 0
      %301 = vmatpush1.bf16.msra.mxu0 %v298
      %302 = vmatprep.subr.bf16.mxu0 0
      %303 = vmatpush1.bf16.msra.mxu0 0
      %304 = vmatprep.subr.bf16.mxu0 0
      %305 = vmatpush1.bf16.msra.mxu0 0
      %306 = vmatprep.subr.bf16.mxu0 0
      %307 = vmatpush1.bf16.msra.mxu0 0
      %308 = vmatprep.subr.bf16.mxu0 0
      %309 = vmatpush1.bf16.msra.mxu0 0
      %310 = vmatprep.subr.bf16.mxu0 0
      %311 = vmatpush1.bf16.msra.mxu0 0
      %312 = vmatprep.subr.bf16.mxu0 0
      %313 = vmatpush1.bf16.msra.mxu0 0
      %314 = vmatprep.subr.bf16.mxu0 0
      %315 = vmatpush1.bf16.msra.mxu0 0
      %316 = vmatprep.subr.bf16.mxu0 0
      %317 = vmatpush1.bf16.msra.mxu0 0
      %318 = vmatprep.subr.bf16.mxu0 0
      %319 = vmatpush1.bf16.msra.mxu0 0
      %320 = vmatprep.subr.bf16.mxu0 0
      %321 = vmatpush1.bf16.msra.mxu0 0
      %322 = vmatprep.subr.bf16.mxu0 0
      %323 = vmatpush1.bf16.msra.mxu0 0
      %324 = vmatprep.subr.bf16.mxu0 0
      %325 = vmatpush1.bf16.msra.mxu0 0
      %326 = vmatprep.subr.bf16.mxu0 0
      %327 = vmatpush1.bf16.msra.mxu0 0
      %328 = vmatprep.subr.bf16.mxu0 0
      %329 = vmatpush1.bf16.msra.mxu0 0
      %330 = vmatprep.subr.bf16.mxu0 0
      %331 = vmatpush1.bf16.msra.mxu0 0
      %332 = vmatprep.mubr.bf16.mxu0 0
      %333 = vmatmul.mubr.bf16.gmra.mrb[0].mxu0 %v291
      %v334 = vpop.f32.mrb[0].mxu0
      %v335 = vadd.f32 0.0, %v334
      %v336 = vpop.f32.mrb[0].mxu0
      %v337 = vpop.f32.mrb[0].mxu0
      %v338 = vadd.f32 0.0, %v337
      %v339 = vpop.f32.mrb[0].mxu0
      %340 = vmatprep.mubr.bf16.mxu0 0
      %341 = vmatmul.mubr.bf16.gmra.mrb[0].mxu0 %v294
      %v342 = vpop.f32.mrb[0].mxu0
      %v343 = vadd.f32 0.0, %v342
      %v344 = vpop.f32.mrb[0].mxu0
      %v345 = vpop.f32.mrb[0].mxu0
      %v346 = vadd.f32 0.0, %v345
      %v347 = vpop.f32.mrb[0].mxu0
      %348 = vdwg.mxu0
      %v349 = vld [vmem:[%s1] sm:$0x1]
      %v351 = vlaneseq
      %v352 = vshrl.u32 %v351, 7
      %v353 = vsub.s32 0, %v352
      %v354 = vrot.slane %v349, %v353
      %vm356 = vcmp.eq.f32.partialorder %v335, %v354
      %vm357 = vcmp.eq.f32.partialorder %v338, %v354
      %vm358 = vcmp.eq.f32.partialorder %v343, %v354
      %vm359 = vcmp.eq.f32.partialorder %v346, %v354
      %v360 = vsel %vm356, 1, 0
      %v361 = vsel %vm357, 1, 0
      %v362 = vsel %vm358, 1, 0
      %v363 = vsel %vm359, 1, 0
      %v364 = vcvt.s32.f32 %v360
      %v365 = vcvt.s32.f32 %v361
      %v366 = vcvt.s32.f32 %v362
      %v367 = vcvt.s32.f32 %v363
      %v368 = vpack.c.bf16 %v365, %v364
      %v369 = vpack.c.bf16 %v367, %v366
      %v370 = vld [vmem:[%s2] sm:$0xf]
      %v371 = vld [vmem:[%s2 + $0x4] sm:$0xf]
      %v372 = vld [vmem:[%s2 + $0x8] sm:$0xf]
      %v373 = vld [vmem:[%s2 + $0xc] sm:$0xf]
      %v374 = vld [vmem:[%s3] sm:$0xf]
      %v375 = vld [vmem:[%s3 + $0x4] sm:$0xf]
      %v376 = vld [vmem:[%s3 + $0x8] sm:$0xf]
      %v377 = vld [vmem:[%s3 + $0xc] sm:$0xf]
      %v382 = vunpack.c.l.b16 %v374
      %v383 = vunpack.c.l.b16 %v375
      %v384 = vunpack.c.l.b16 %v376
      %v385 = vunpack.c.l.b16 %v377
      %v386 = vpack.c.b16 %v383, %v382
      %v387 = vpack.c.b16 %v385, %v384
      %vm390 = vcmask 261120
      %v392 = vsel %vm390, %v368, 0
      %v395 = vsel %vm390, %v369, 0
      %397 = vmatprep.subr.bf16.mxu0 0
      %398 = vmatpush1.bf16.msra.mxu0 %v386
      %399 = vmatprep.subr.bf16.mxu0 0
      %400 = vmatpush1.bf16.msra.mxu0 %v387
      %401 = vmatprep.subr.bf16.mxu0 0
      %402 = vmatpush1.bf16.msra.mxu0 0
      %403 = vmatprep.subr.bf16.mxu0 0
      %404 = vmatpush1.bf16.msra.mxu0 0
      %405 = vmatprep.subr.bf16.mxu0 0
      %406 = vmatpush1.bf16.msra.mxu0 0
      %407 = vmatprep.subr.bf16.mxu0 0
      %408 = vmatpush1.bf16.msra.mxu0 0
      %409 = vmatprep.subr.bf16.mxu0 0
      %410 = vmatpush1.bf16.msra.mxu0 0
      %411 = vmatprep.subr.bf16.mxu0 0
      %412 = vmatpush1.bf16.msra.mxu0 0
      %413 = vmatprep.subr.bf16.mxu0 0
      %414 = vmatpush1.bf16.msra.mxu0 0
      %415 = vmatprep.subr.bf16.mxu0 0
      %416 = vmatpush1.bf16.msra.mxu0 0
      %417 = vmatprep.subr.bf16.mxu0 0
      %418 = vmatpush1.bf16.msra.mxu0 0
      %419 = vmatprep.subr.bf16.mxu0 0
      %420 = vmatpush1.bf16.msra.mxu0 0
      %421 = vmatprep.subr.bf16.mxu0 0
      %422 = vmatpush1.bf16.msra.mxu0 0
      %423 = vmatprep.subr.bf16.mxu0 0
      %424 = vmatpush1.bf16.msra.mxu0 0
      %425 = vmatprep.subr.bf16.mxu0 0
      %426 = vmatpush1.bf16.msra.mxu0 0
      %427 = vmatprep.subr.bf16.mxu0 0
      %428 = vmatpush1.bf16.msra.mxu0 0
      %429 = vmatprep.mubr.bf16.mxu0 0
      %430 = vmatmul.mubr.bf16.gmra.mrb[0].mxu0 %v392
      %v431 = vpop.f32.mrb[0].mxu0
      %v432 = vadd.f32 0.0, %v431
      %v433 = vpop.f32.mrb[0].mxu0
      %v434 = vpop.f32.mrb[0].mxu0
      %v435 = vadd.f32 0.0, %v434
      %v436 = vpop.f32.mrb[0].mxu0
      %437 = vmatprep.mubr.bf16.mxu0 0
      %438 = vmatmul.mubr.bf16.gmra.mrb[0].mxu0 %v395
      %v439 = vpop.f32.mrb[0].mxu0
      %v440 = vadd.f32 0.0, %v439
      %v441 = vpop.f32.mrb[0].mxu0
      %v442 = vpop.f32.mrb[0].mxu0
      %v443 = vadd.f32 0.0, %v442
      %v444 = vpop.f32.mrb[0].mxu0
      %445 = vdwg.mxu0
      %v450 = vunpack.c.l.b16 %v370
      %v451 = vunpack.c.l.b16 %v371
      %v452 = vunpack.c.l.b16 %v372
      %v453 = vunpack.c.l.b16 %v373
      %v454 = vpack.c.b16 %v451, %v450
      %v455 = vpack.c.b16 %v453, %v452
      %458 = vmatprep.subr.bf16.mxu0 0
      %459 = vmatpush1.bf16.msra.mxu0 %v454
      %460 = vmatprep.subr.bf16.mxu0 0
      %461 = vmatpush1.bf16.msra.mxu0 %v455
      %462 = vmatprep.subr.bf16.mxu0 0
      %463 = vmatpush1.bf16.msra.mxu0 0
      %464 = vmatprep.subr.bf16.mxu0 0
      %465 = vmatpush1.bf16.msra.mxu0 0
      %466 = vmatprep.subr.bf16.mxu0 0
      %467 = vmatpush1.bf16.msra.mxu0 0
      %468 = vmatprep.subr.bf16.mxu0 0
      %469 = vmatpush1.bf16.msra.mxu0 0
      %470 = vmatprep.subr.bf16.mxu0 0
      %471 = vmatpush1.bf16.msra.mxu0 0
      %472 = vmatprep.subr.bf16.mxu0 0
      %473 = vmatpush1.bf16.msra.mxu0 0
      %474 = vmatprep.subr.bf16.mxu0 0
      %475 = vmatpush1.bf16.msra.mxu0 0
      %476 = vmatprep.subr.bf16.mxu0 0
      %477 = vmatpush1.bf16.msra.mxu0 0
      %478 = vmatprep.subr.bf16.mxu0 0
      %479 = vmatpush1.bf16.msra.mxu0 0
      %480 = vmatprep.subr.bf16.mxu0 0
      %481 = vmatpush1.bf16.msra.mxu0 0
      %482 = vmatprep.subr.bf16.mxu0 0
      %483 = vmatpush1.bf16.msra.mxu0 0
      %484 = vmatprep.subr.bf16.mxu0 0
      %485 = vmatpush1.bf16.msra.mxu0 0
      %486 = vmatprep.subr.bf16.mxu0 0
      %487 = vmatpush1.bf16.msra.mxu0 0
      %488 = vmatprep.subr.bf16.mxu0 0
      %489 = vmatpush1.bf16.msra.mxu0 0
      %490 = vmatprep.mubr.bf16.mxu0 0
      %491 = vmatmul.mubr.bf16.gmra.mrb[0].mxu0 %v392
      %v492 = vpop.f32.mrb[0].mxu0
      %v493 = vadd.f32 %v432, %v492
      %v494 = vpop.f32.mrb[0].mxu0
      %v495 = vpop.f32.mrb[0].mxu0
      %v496 = vadd.f32 %v435, %v495
      %v497 = vpop.f32.mrb[0].mxu0
      %498 = vmatprep.mubr.bf16.mxu0 0
      %499 = vmatmul.mubr.bf16.gmra.mrb[0].mxu0 %v395
      %v500 = vpop.f32.mrb[0].mxu0
      %v501 = vadd.f32 %v440, %v500
      %v502 = vpop.f32.mrb[0].mxu0
      %v503 = vpop.f32.mrb[0].mxu0
      %v504 = vadd.f32 %v443, %v503
      %v505 = vpop.f32.mrb[0].mxu0
      %506 = vdwg.mxu0
      %v507 = vld [vmem:[%s263] sm:$0xff]
      %v508 = vld [vmem:[%s263 + $0x8] sm:$0xff]
      %v509 = vld [vmem:[%s263 + $0x10] sm:$0xff]
      %v510 = vld [vmem:[%s263 + $0x18] sm:$0xff]
      %v511 = vmul.f32 %v507, %v493
      %v512 = vmul.f32 %v508, %v496
      %v513 = vmul.f32 %v509, %v501
      %v514 = vmul.f32 %v510, %v504
      %515 = vst [vmem:[%s275] sm:$0xff] %v511
      %516 = vst [vmem:[%s275 + $0x8] sm:$0xff] %v512
      %517 = vst [vmem:[%s275 + $0x10] sm:$0xff] %v513
      %518 = vst [vmem:[%s275 + $0x18] sm:$0xff] %v514
      %s519 = smul.u32 4, %s17
      %p520 = scmp.lt.s32.totalorder %s519, 15
      %s521 = scalar_select %p520, %s519, 15
      %s522 = smul.addr %s521, 8
      %s523 = scalar_lea.vmem %s6, %s522
      // Predicated region
      $region45: #{flatten_se_layer.3} parent=43 // pred_check
        %p524 = pneg %p171
      $region46: #{flatten_se_layer.3} parent=43 // pred_check_branch
        %526 = sbr.rel (%p524) target = $region48
      $region47: #{flatten_se_layer.3} parent=43 // pred_region
        %s527 = smul.u32 4, %s17
      $region48: #{flatten_se_layer.3} parent=43 // pred_fallthru
        _
    $region44: #{flatten_se_layer.3} parent=5 // pred_fallthru
      _
    %p528 = scmp.le.s32.totalorder 2, %s12
    // Predicated region
    $region49: #{flatten_se_layer.3} parent=5 // pred_check
      %p529 = pneg %p528
    $region50: #{flatten_se_layer.3} parent=5 // pred_check_branch
      %531 = sbr.rel (%p529) target = $region52
    $region51: #{flatten_se_layer.3} parent=5 // pred_region
      %s532 = ssub.s32 %s12, 2
      // Predicated region
      $region53: #{flatten_se_layer.3} parent=51 // pred_check
        %p533 = pneg %p177
      $region54: #{flatten_se_layer.3} parent=51 // pred_check_branch
        %535 = sbr.rel (%p533) target = $region56
      $region55: #{flatten_se_layer.3} parent=51 // pred_region
        %s536 = smul.u32 4, %s18
        %p537 = scmp.lt.s32.totalorder %s536, 15
        %s538 = scalar_select %p537, %s536, 15
        %s539 = smul.addr %s538, 8
        %s540 = scalar_lea.vmem %s6, %s539
      $region56: #{flatten_se_layer.3} parent=51 // pred_fallthru
        _
    $region52: #{flatten_se_layer.3} parent=5 // pred_fallthru
      _
  $region6: #{flatten_se_layer.3} parent=0 // loop_footer
    %s16 = sadd.s32 1, %s12
  $region7: #{flatten_se_layer.3} parent=0 // loop_footer_branch
    %11 = sbr.rel target = $region3
  $region8: #{flatten_se_layer.3} parent=0 // loop_exit
    _

</llo_original>
